<compile_context>
chip_gen: v7x
topology: tpu7x:2x2x1
jax: 0.10.0
libtpu: 0.0.40
codegen_flags: <defaults>
</compile_context>

<pallas_src>
import functools

import jax
import jax.numpy as jnp
from jax.experimental import pallas as pl
from jax.experimental.pallas import tpu as pltpu

_BN_EPS = 1e-5


# ----------------------------------------------------------------------------
# Kernel
# ----------------------------------------------------------------------------
def _tap(pad_ref, dy, dx, th, wo, stride):
    """(th, wo, Cin) window of the zero-padded input tile for tap (dy, dx)."""
    if stride == 1:
        return pad_ref[dy:dy + th, dx:dx + wo, :]
    # TODO(synk): stride>1 uses an in-register strided slice (untested on
    # Mosaic); a strided-DMA BlockSpec would be the production path.
    xv = pad_ref[...]
    return jax.lax.slice(
        xv, (dy, dx, 0),
        (dy + (th - 1) * stride + 1, dx + (wo - 1) * stride + 1, xv.shape[-1]),
        (stride, stride, 1))


def _conv3x3_bn_kernel(*refs, stride, th, wo, h_in, relu,
                       fuse_shortcut, add_residual):
    it = iter(refs)
    x_mid_ref = next(it)       # (1, th*stride, W, Cin)  rows of this tile
    x_top_ref = next(it)       # (1, 1, W, Cin)          halo row above
    x_bot_ref = next(it)       # (1, 1, W, Cin)          halo row below
    w_ref = next(it)           # (9*Cin, TC)   BN scale already folded in
    b_ref = next(it)           # (1, TC)       folded BN bias (f32)
    if fuse_shortcut:
        wsc_ref = next(it)     # (Cin, TC)     folded 1x1 shortcut weights
        bsc_ref = next(it)     # (1, TC)
    if add_residual:
        res_ref = next(it)     # (1, th*wo, TC)
    o_ref = next(it)           # (1, th*wo, TC)
    if fuse_shortcut:
        osc_ref = next(it)     # (1, th*wo, TC)
    pad_ref = next(it)         # VMEM scratch (th*stride + 2, W + 2, Cin)

    t = pl.program_id(1)
    th_in = th * stride
    w_img = x_mid_ref.shape[2]

    # Zero-padded input tile built in VMEM (no jnp.pad HBM pass).
    pad_ref[...] = jnp.zeros(pad_ref.shape, pad_ref.dtype)
    pad_ref[1:1 + th_in, 1:1 + w_img, :] = x_mid_ref[0]

    @pl.when(t > 0)
    def _load_top_halo():
        pad_ref[0, 1:1 + w_img, :] = x_top_ref[0, 0]

    @pl.when((t + 1) * th_in < h_in)
    def _load_bot_halo():
        pad_ref[th_in + 1, 1:1 + w_img, :] = x_bot_ref[0, 0]

    # im2col: one deep matmul (K = 9*Cin) per tile instead of 9 shallow ones.
    pieces = [_tap(pad_ref, dy, dx, th, wo, stride)
              for dy in range(3) for dx in range(3)]
    patch = jnp.concatenate(pieces, axis=-1)            # (th, wo, 9*Cin)
    patch = patch.reshape(th * wo, patch.shape[-1])     # lane-dense 2-D slab

    acc = jnp.dot(patch, w_ref[...], preferred_element_type=jnp.float32)
    out = acc + b_ref[...]                              # folded BN bias
    if add_residual:
        out = out + res_ref[0].astype(jnp.float32)
    if relu:
        out = jnp.maximum(out, 0.0)
    o_ref[0] = out.astype(o_ref.dtype)

    if fuse_shortcut:
        # 1x1 projection shortcut: the centre tap is exactly x[y*s, x*s, :].
        centre = _tap(pad_ref, 1, 1, th, wo, stride)
        sc = jnp.dot(centre.reshape(th * wo, centre.shape[-1]), wsc_ref[...],
                     preferred_element_type=jnp.float32) + bsc_ref[...]
        osc_ref[0] = sc.astype(osc_ref.dtype)


# ----------------------------------------------------------------------------
# Wrapper
# ----------------------------------------------------------------------------
def _pick_row_tile(ho, wo, max_rows):
    """Output rows per grid step: largest divisor of ho whose tile keeps
    (rows*wo) % 8 == 0 and fits the row budget; full plane is the fallback."""
    if ho * wo <= max_rows:
        return ho
    best = None
    for th in range(1, ho):
        if ho % th == 0 and (th * wo) % 8 == 0 and th * wo <= max_rows:
            best = th
    return best if best is not None else ho


def _pick_cout_tile(cout):
    # 256 feeds the 256-wide MXUs of v6e/v7x (v5e is happy with 128 too);
    # fall back to the full channel dim when it is not 128-aligned.
    for tc in (256, 128):
        if cout % tc == 0:
            return tc
    return cout


def conv3x3_bn(x, w_hwio, bn_scale, bn_bias, *, stride=1, relu=True,
               residual=None, shortcut=None, out_dtype=jnp.bfloat16,
               compute_dtype=jnp.bfloat16, max_tile_rows=1024):
    """Fused 3x3 conv (pad=1, no bias) + folded BN [+ residual] [+ ReLU].

    Optionally fuses the BasicBlock's 1x1 projection shortcut (which reads the
    same input tile) as a second output.

    x:        (N, H, W, Cin) NHWC
    w_hwio:   (3, 3, Cin, Cout)
    residual: (N, Ho, Wo, Cout) or None (added before the ReLU)
    shortcut: None or (w_1x1_hwio, sc_scale, sc_bias)
    returns:  (N, Ho, Wo, Cout)  [, shortcut output of the same shape]
    """
    n, h, w, cin = x.shape
    cout = w_hwio.shape[-1]
    assert w_hwio.shape[:3] == (3, 3, cin)
    assert h % stride == 0 and w % stride == 0
    ho, wo = h // stride, w // stride
    th = _pick_row_tile(ho, wo, max_tile_rows)
    tc = _pick_cout_tile(cout)
    th_in = th * stride

    xc = x.astype(compute_dtype)
    # Fold the BN scale into the conv weights; only the bias stays in-kernel.
    w_main = (w_hwio * bn_scale[None, None, None, :]).reshape(
        9 * cin, cout).astype(compute_dtype)
    b_main = bn_bias.reshape(1, cout).astype(jnp.float32)

    in_specs = [
        pl.BlockSpec((1, th_in, w, cin), lambda b, t, c: (b, t, 0, 0)),
        pl.BlockSpec((1, 1, w, cin),
                     lambda b, t, c: (b, jnp.maximum(t * th_in - 1, 0), 0, 0)),
        pl.BlockSpec((1, 1, w, cin),
                     lambda b, t, c: (b, jnp.minimum(t * th_in + th_in, h - 1),
                                      0, 0)),
        pl.BlockSpec((9 * cin, tc), lambda b, t, c: (0, c)),
        pl.BlockSpec((1, tc), lambda b, t, c: (0, c)),
    ]
    args = [xc, xc, xc, w_main, b_main]

    if shortcut is not None:
        w_sc, sc_scale, sc_bias = shortcut
        wsc = (w_sc[0, 0] * sc_scale[None, :]).astype(compute_dtype)  # (Cin, Cout)
        bsc = sc_bias.reshape(1, cout).astype(jnp.float32)
        in_specs += [pl.BlockSpec((cin, tc), lambda b, t, c: (0, c)),
                     pl.BlockSpec((1, tc), lambda b, t, c: (0, c))]
        args += [wsc, bsc]

    if residual is not None:
        res = residual.reshape(n, ho * wo, cout).astype(compute_dtype)
        in_specs.append(
            pl.BlockSpec((1, th * wo, tc), lambda b, t, c: (b, t, c)))
        args.append(res)

    out_spec = pl.BlockSpec((1, th * wo, tc), lambda b, t, c: (b, t, c))
    if shortcut is not None:
        out_shape = (jax.ShapeDtypeStruct((n, ho * wo, cout), out_dtype),
                     jax.ShapeDtypeStruct((n, ho * wo, cout), out_dtype))
        out_specs = (out_spec, out_spec)
    else:
        out_shape = jax.ShapeDtypeStruct((n, ho * wo, cout), out_dtype)
        out_specs = out_spec

    kernel = functools.partial(
        _conv3x3_bn_kernel, stride=stride, th=th, wo=wo, h_in=h, relu=relu,
        fuse_shortcut=shortcut is not None, add_residual=residual is not None)

    outs = pl.pallas_call(
        kernel,
        out_shape=out_shape,
        grid_spec=pltpu.PrefetchScalarGridSpec(
            num_scalar_prefetch=0,
            grid=(n, ho // th, cout // tc),
            in_specs=in_specs,
            out_specs=out_specs,
            scratch_shapes=[pltpu.VMEM((th_in + 2, w + 2, cin),
                                       compute_dtype)]),
        compiler_params=pltpu.CompilerParams(
            dimension_semantics=("parallel", "parallel", "parallel"),
            vmem_limit_bytes=48 * 1024 * 1024),
    )(*args)

    if shortcut is not None:
        out, sc_out = outs
        return out.reshape(n, ho, wo, cout), sc_out.reshape(n, ho, wo, cout)
    return outs.reshape(n, ho, wo, cout)


# ----------------------------------------------------------------------------
# BasicBlock glue
# ----------------------------------------------------------------------------
def _fold_bn(bn):
    gamma, beta, mean, var = bn
    scale = gamma / jnp.sqrt(var + _BN_EPS)
    return scale, beta - mean * scale


def basic_block_forward_nhwc(x_nhwc, params, stride=1, max_tile_rows=1024):
    """out = relu(bn2(conv2(relu(bn1(conv1(x))))) + shortcut(x)), NHWC I/O."""
    s1, b1 = _fold_bn(params["bn1"])
    s2, b2 = _fold_bn(params["bn2"])

    if "w_sc" in params:   # projection shortcut -> fused into the first call
        ssc, bsc = _fold_bn(params["bn_sc"])
        out1, shortcut = conv3x3_bn(
            x_nhwc, params["w1"], s1, b1, stride=stride, relu=True,
            shortcut=(params["w_sc"], ssc, bsc), max_tile_rows=max_tile_rows)
    else:                  # identity shortcut (stride == 1, Cin == Cout)
        out1 = conv3x3_bn(x_nhwc, params["w1"], s1, b1, stride=stride,
                          relu=True, max_tile_rows=max_tile_rows)
        shortcut = x_nhwc

    return conv3x3_bn(out1, params["w2"], s2, b2, stride=1, relu=True,
                      residual=shortcut, out_dtype=jnp.float32,
                      max_tile_rows=max_tile_rows)


def basic_block_forward(x_nchw, params, stride=1, max_tile_rows=1024):
    """PyTorch-layout wrapper (NCHW in / NCHW out). In a full network keep
    everything NHWC and call basic_block_forward_nhwc to avoid per-block
    transposes."""
    x = jnp.transpose(x_nchw, (0, 2, 3, 1))
    out = basic_block_forward_nhwc(x, params, stride, max_tile_rows)
    return jnp.transpose(out, (0, 3, 1, 2))


def init_basic_block_params(key, in_channels, out_channels, stride=1):
    ks = jax.random.split(key, 12)
    p = {}
    p["w1"] = 0.1 * jax.random.normal(ks[0], (3, 3, in_channels, out_channels),
                                      jnp.float32)
    p["bn1"] = (0.5 + jax.random.uniform(ks[1], (out_channels,)),
                0.1 * jax.random.normal(ks[2], (out_channels,)),
                0.1 * jax.random.normal(ks[3], (out_channels,)),
                0.5 + jax.random.uniform(ks[4], (out_channels,)))
    p["w2"] = 0.1 * jax.random.normal(ks[5], (3, 3, out_channels, out_channels),
                                      jnp.float32)
    p["bn2"] = (0.5 + jax.random.uniform(ks[6], (out_channels,)),
                0.1 * jax.random.normal(ks[7], (out_channels,)),
                0.1 * jax.random.normal(ks[8], (out_channels,)),
                0.5 + jax.random.uniform(ks[9], (out_channels,)))
    if stride != 1 or in_channels != out_channels:
        p["w_sc"] = 0.1 * jax.random.normal(
            ks[10], (1, 1, in_channels, out_channels), jnp.float32)
        kb = jax.random.split(ks[11], 4)
        p["bn_sc"] = (0.5 + jax.random.uniform(kb[0], (out_channels,)),
                      0.1 * jax.random.normal(kb[1], (out_channels,)),
                      0.1 * jax.random.normal(kb[2], (out_channels,)),
                      0.5 + jax.random.uniform(kb[3], (out_channels,)))
    return p


# ----------------------------------------------------------------------------
# Pure-JAX reference (f32, XLA convs, PyTorch semantics) for verification.
# ----------------------------------------------------------------------------
def _ref_forward(x_nchw, params, stride=1):
    def conv(x, w, s, pad):
        return jax.lax.conv_general_dilated(
            x, w, (s, s), ((pad, pad), (pad, pad)),
            dimension_numbers=("NCHW", "HWIO", "NCHW"))

    def bn(x, p):
        g, b, m, v = p
        inv = g / jnp.sqrt(v + _BN_EPS)
        return (x - m[None, :, None, None]) * inv[None, :, None, None] \
            + b[None, :, None, None]

    out = jax.nn.relu(bn(conv(x_nchw, params["w1"], stride, 1), params["bn1"]))
    out = bn(conv(out, params["w2"], 1, 1), params["bn2"])
    sc = x_nchw
    if "w_sc" in params:
        sc = bn(conv(x_nchw, params["w_sc"], stride, 0), params["bn_sc"])
    return jax.nn.relu(out + sc)


if __name__ == "__main__":
    key = jax.random.PRNGKey(0)
    k_x, k_p, k_x2, k_p2 = jax.random.split(key, 4)

    # Config A: projection shortcut (Cin != Cout), stride 1.  Small row-tile
    # budget so the multi-tile / halo path is exercised (4 row tiles of 16x16).
    batch, in_c, out_c, hw, stride = 2, 4, 8, 16, 1
    x = jax.random.normal(k_x, (batch, in_c, hw, hw), jnp.float32)  # NCHW
    params = init_basic_block_params(k_p, in_c, out_c, stride=stride)
    out = jax.block_until_ready(
        basic_block_forward(x, params, stride=stride, max_tile_rows=64))
    ref = jax.block_until_ready(_ref_forward(x, params, stride=stride))
    assert out.shape == ref.shape == (batch, out_c, hw, hw)
    err = float(jnp.max(jnp.abs(out - ref)))
    # bf16 operands with f32 accumulation -> bf16-level tolerance.
    assert jnp.allclose(out, ref, atol=5e-2, rtol=5e-2), f"max abs err {err}"

    # Config B: identity shortcut (Cin == Cout, stride 1), default tiling
    # (single row tile -> no-halo path).
    x_b = jax.random.normal(k_x2, (batch, out_c, hw, hw), jnp.float32)
    params_b = init_basic_block_params(k_p2, out_c, out_c, stride=1)
    out_b = jax.block_until_ready(basic_block_forward(x_b, params_b, stride=1))
    ref_b = jax.block_until_ready(_ref_forward(x_b, params_b, stride=1))
    err_b = float(jnp.max(jnp.abs(out_b - ref_b)))
    assert jnp.allclose(out_b, ref_b, atol=5e-2, rtol=5e-2), \
        f"max abs err {err_b}"

    print("KERNEL_OK")
</pallas_src>

<mosaic_0001>
module attributes {stable_mosaic.version = 11 : i64} {
  func.func @_conv3x3_bn_kernel(%arg0: i32, %arg1: i32, %arg2: i32, %arg3: memref<1x4x16x4xbf16, #tpu.memory_space<vmem>>, %arg4: memref<1x1x16x4xbf16, #tpu.memory_space<vmem>>, %arg5: memref<1x1x16x4xbf16, #tpu.memory_space<vmem>>, %arg6: memref<36x8xbf16, #tpu.memory_space<vmem>>, %arg7: memref<1x8xf32, #tpu.memory_space<vmem>>, %arg8: memref<4x8xbf16, #tpu.memory_space<vmem>>, %arg9: memref<1x8xf32, #tpu.memory_space<vmem>>, %arg10: memref<1x64x8xbf16, #tpu.memory_space<vmem>>, %arg11: memref<1x64x8xbf16, #tpu.memory_space<vmem>>, %arg12: memref<6x18x4xbf16, #tpu.memory_space<vmem>>) attributes {dimension_semantics = [#tpu.dimension_semantics<parallel>, #tpu.dimension_semantics<parallel>, #tpu.dimension_semantics<parallel>], iteration_bounds = array<i64: 2, 4, 1>, scalar_prefetch = 0 : i64, scratch_operands = 1 : i64, tpu.core_type = #tpu.core_type<tc>, window_params = [{transform_indices = @transform_0, window_bounds = array<i64: 1, 4, 16, 4>}, {transform_indices = @transform_1, window_bounds = array<i64: 1, 1, 16, 4>}, {transform_indices = @transform_2, window_bounds = array<i64: 1, 1, 16, 4>}, {transform_indices = @transform_3, window_bounds = array<i64: 36, 8>}, {transform_indices = @transform_4, window_bounds = array<i64: 1, 8>}, {transform_indices = @transform_5, window_bounds = array<i64: 4, 8>}, {transform_indices = @transform_6, window_bounds = array<i64: 1, 8>}, {transform_indices = @transform_7, window_bounds = array<i64: 1, 64, 8>}, {transform_indices = @transform_8, window_bounds = array<i64: 1, 64, 8>}]} {
    %cst = arith.constant 0.000000e+00 : bf16
    %0 = vector.broadcast %cst : bf16 to vector<6x18x4xbf16>
    %c0 = arith.constant 0 : index
    %c0_0 = arith.constant 0 : index
    %c0_1 = arith.constant 0 : index
    %1 = vector.load %arg12[%c0, %c0_0, %c0_1] : memref<6x18x4xbf16, #tpu.memory_space<vmem>>, vector<6x18x4xbf16>
    tpu.vector_store %arg12[%c0, %c0_0, %c0_1], %0 {strides = array<i32>} : memref<6x18x4xbf16, #tpu.memory_space<vmem>>, vector<6x18x4xbf16>,
    %c0_2 = arith.constant 0 : index
    %c0_3 = arith.constant 0 : index
    %c0_4 = arith.constant 0 : index
    %c0_5 = arith.constant 0 : index
    %2 = vector.load %arg3[%c0_2, %c0_3, %c0_4, %c0_5] : memref<1x4x16x4xbf16, #tpu.memory_space<vmem>>, vector<1x4x16x4xbf16>
    %3 = vector.shape_cast %2 : vector<1x4x16x4xbf16> to vector<4x16x4xbf16>
    %c1 = arith.constant 1 : index
    %c1_6 = arith.constant 1 : index
    %c0_7 = arith.constant 0 : index
    %4 = vector.load %arg12[%c1, %c1_6, %c0_7] : memref<6x18x4xbf16, #tpu.memory_space<vmem>>, vector<4x16x4xbf16>
    tpu.vector_store %arg12[%c1, %c1_6, %c0_7], %3 {strides = array<i32>} : memref<6x18x4xbf16, #tpu.memory_space<vmem>>, vector<4x16x4xbf16>,
    %c0_i32 = arith.constant 0 : i32
    %5 = arith.cmpi sgt, %arg1, %c0_i32 : i32
    %6 = arith.extui %5 : i1 to i32
    %c0_i32_8 = arith.constant 0 : i32
    %7 = arith.cmpi ne, %6, %c0_i32_8 : i32
    scf.if %7 {
      %c0_56 = arith.constant 0 : index
      %c0_57 = arith.constant 0 : index
      %c0_58 = arith.constant 0 : index
      %c0_59 = arith.constant 0 : index
      %46 = vector.load %arg4[%c0_56, %c0_57, %c0_58, %c0_59] : memref<1x1x16x4xbf16, #tpu.memory_space<vmem>>, vector<1x1x16x4xbf16>
      %47 = vector.shape_cast %46 : vector<1x1x16x4xbf16> to vector<16x4xbf16>
      %c0_60 = arith.constant 0 : index
      %c1_61 = arith.constant 1 : index
      %c0_62 = arith.constant 0 : index
      %48 = vector.load %arg12[%c0_60, %c1_61, %c0_62] : memref<6x18x4xbf16, #tpu.memory_space<vmem>>, vector<1x16x4xbf16>
      %49 = vector.shape_cast %48 : vector<1x16x4xbf16> to vector<16x4xbf16>
      %50 = vector.shape_cast %47 : vector<16x4xbf16> to vector<1x16x4xbf16>
      tpu.vector_store %arg12[%c0_60, %c1_61, %c0_62], %50 {strides = array<i32>} : memref<6x18x4xbf16, #tpu.memory_space<vmem>>, vector<1x16x4xbf16>,
    } else {
    }
    %c1_i32 = arith.constant 1 : i32
    %8 = arith.addi %arg1, %c1_i32 : i32
    %c4_i32 = arith.constant 4 : i32
    %9 = arith.muli %8, %c4_i32 : i32
    %c16_i32 = arith.constant 16 : i32
    %10 = arith.cmpi slt, %9, %c16_i32 : i32
    %11 = arith.extui %10 : i1 to i32
    %c0_i32_9 = arith.constant 0 : i32
    %12 = arith.cmpi ne, %11, %c0_i32_9 : i32
    scf.if %12 {
      %c0_56 = arith.constant 0 : index
      %c0_57 = arith.constant 0 : index
      %c0_58 = arith.constant 0 : index
      %c0_59 = arith.constant 0 : index
      %46 = vector.load %arg5[%c0_56, %c0_57, %c0_58, %c0_59] : memref<1x1x16x4xbf16, #tpu.memory_space<vmem>>, vector<1x1x16x4xbf16>
      %47 = vector.shape_cast %46 : vector<1x1x16x4xbf16> to vector<16x4xbf16>
      %c5 = arith.constant 5 : index
      %c1_60 = arith.constant 1 : index
      %c0_61 = arith.constant 0 : index
      %48 = vector.load %arg12[%c5, %c1_60, %c0_61] : memref<6x18x4xbf16, #tpu.memory_space<vmem>>, vector<1x16x4xbf16>
      %49 = vector.shape_cast %48 : vector<1x16x4xbf16> to vector<16x4xbf16>
      %50 = vector.shape_cast %47 : vector<16x4xbf16> to vector<1x16x4xbf16>
      tpu.vector_store %arg12[%c5, %c1_60, %c0_61], %50 {strides = array<i32>} : memref<6x18x4xbf16, #tpu.memory_space<vmem>>, vector<1x16x4xbf16>,
    } else {
    }
    %c0_10 = arith.constant 0 : index
    %c0_11 = arith.constant 0 : index
    %c0_12 = arith.constant 0 : index
    %13 = vector.load %arg12[%c0_10, %c0_11, %c0_12] : memref<6x18x4xbf16, #tpu.memory_space<vmem>>, vector<4x16x4xbf16>
    %c0_13 = arith.constant 0 : index
    %c1_14 = arith.constant 1 : index
    %c0_15 = arith.constant 0 : index
    %14 = vector.load %arg12[%c0_13, %c1_14, %c0_15] : memref<6x18x4xbf16, #tpu.memory_space<vmem>>, vector<4x16x4xbf16>
    %c0_16 = arith.constant 0 : index
    %c2 = arith.constant 2 : index
    %c0_17 = arith.constant 0 : index
    %15 = vector.load %arg12[%c0_16, %c2, %c0_17] : memref<6x18x4xbf16, #tpu.memory_space<vmem>>, vector<4x16x4xbf16>
    %c1_18 = arith.constant 1 : index
    %c0_19 = arith.constant 0 : index
    %c0_20 = arith.constant 0 : index
    %16 = vector.load %arg12[%c1_18, %c0_19, %c0_20] : memref<6x18x4xbf16, #tpu.memory_space<vmem>>, vector<4x16x4xbf16>
    %c1_21 = arith.constant 1 : index
    %c1_22 = arith.constant 1 : index
    %c0_23 = arith.constant 0 : index
    %17 = vector.load %arg12[%c1_21, %c1_22, %c0_23] : memref<6x18x4xbf16, #tpu.memory_space<vmem>>, vector<4x16x4xbf16>
    %c1_24 = arith.constant 1 : index
    %c2_25 = arith.constant 2 : index
    %c0_26 = arith.constant 0 : index
    %18 = vector.load %arg12[%c1_24, %c2_25, %c0_26] : memref<6x18x4xbf16, #tpu.memory_space<vmem>>, vector<4x16x4xbf16>
    %c2_27 = arith.constant 2 : index
    %c0_28 = arith.constant 0 : index
    %c0_29 = arith.constant 0 : index
    %19 = vector.load %arg12[%c2_27, %c0_28, %c0_29] : memref<6x18x4xbf16, #tpu.memory_space<vmem>>, vector<4x16x4xbf16>
    %c2_30 = arith.constant 2 : index
    %c1_31 = arith.constant 1 : index
    %c0_32 = arith.constant 0 : index
    %20 = vector.load %arg12[%c2_30, %c1_31, %c0_32] : memref<6x18x4xbf16, #tpu.memory_space<vmem>>, vector<4x16x4xbf16>
    %c2_33 = arith.constant 2 : index
    %c2_34 = arith.constant 2 : index
    %c0_35 = arith.constant 0 : index
    %21 = vector.load %arg12[%c2_33, %c2_34, %c0_35] : memref<6x18x4xbf16, #tpu.memory_space<vmem>>, vector<4x16x4xbf16>
    %22 = tpu.concatenate %13, %14, %15, %16, %17, %18, %19, %20, %21 in 2 : vector<4x16x4xbf16>, vector<4x16x4xbf16>, vector<4x16x4xbf16>, vector<4x16x4xbf16>, vector<4x16x4xbf16>, vector<4x16x4xbf16>, vector<4x16x4xbf16>, vector<4x16x4xbf16>, vector<4x16x4xbf16> -> vector<4x16x36xbf16>
    %23 = vector.shape_cast %22 : vector<4x16x36xbf16> to vector<64x36xbf16>
    %c0_36 = arith.constant 0 : index
    %c0_37 = arith.constant 0 : index
    %24 = vector.load %arg6[%c0_36, %c0_37] : memref<36x8xbf16, #tpu.memory_space<vmem>>, vector<36x8xbf16>
    %cst_38 = arith.constant dense<0.000000e+00> : vector<64x8xf32>
    %25 = tpu.matmul %23, %24, %cst_38 {dimension_numbers = #tpu.dot_dimension_numbers<[1], [0], [0], [1], [0, 0, 1, 1], [], []>} : vector<64x36xbf16>, vector<36x8xbf16>, vector<64x8xf32> -> vector<64x8xf32>
    %c0_39 = arith.constant 0 : index
    %c0_40 = arith.constant 0 : index
    %26 = vector.load %arg7[%c0_39, %c0_40] : memref<1x8xf32, #tpu.memory_space<vmem>>, vector<1x8xf32>
    %27 = vector.broadcast %26 : vector<1x8xf32> to vector<64x8xf32>
    %28 = arith.addf %25, %27 : vector<64x8xf32>
    %cst_41 = arith.constant 0.000000e+00 : f32
    %29 = vector.broadcast %cst_41 : f32 to vector<64x8xf32>
    %30 = arith.maximumf %28, %29 : vector<64x8xf32>
    %31 = arith.truncf %30 : vector<64x8xf32> to vector<64x8xbf16>
    %c0_42 = arith.constant 0 : index
    %c0_43 = arith.constant 0 : index
    %c0_44 = arith.constant 0 : index
    %32 = vector.load %arg10[%c0_42, %c0_43, %c0_44] : memref<1x64x8xbf16, #tpu.memory_space<vmem>>, vector<1x64x8xbf16>
    %33 = vector.shape_cast %32 : vector<1x64x8xbf16> to vector<64x8xbf16>
    %34 = vector.shape_cast %31 : vector<64x8xbf16> to vector<1x64x8xbf16>
    tpu.vector_store %arg10[%c0_42, %c0_43, %c0_44], %34 {strides = array<i32>} : memref<1x64x8xbf16, #tpu.memory_space<vmem>>, vector<1x64x8xbf16>,
    %c1_45 = arith.constant 1 : index
    %c1_46 = arith.constant 1 : index
    %c0_47 = arith.constant 0 : index
    %35 = vector.load %arg12[%c1_45, %c1_46, %c0_47] : memref<6x18x4xbf16, #tpu.memory_space<vmem>>, vector<4x16x4xbf16>
    %36 = vector.shape_cast %35 : vector<4x16x4xbf16> to vector<64x4xbf16>
    %c0_48 = arith.constant 0 : index
    %c0_49 = arith.constant 0 : index
    %37 = vector.load %arg8[%c0_48, %c0_49] : memref<4x8xbf16, #tpu.memory_space<vmem>>, vector<4x8xbf16>
    %cst_50 = arith.constant dense<0.000000e+00> : vector<64x8xf32>
    %38 = tpu.matmul %36, %37, %cst_50 {dimension_numbers = #tpu.dot_dimension_numbers<[1], [0], [0], [1], [0, 0, 1, 1], [], []>} : vector<64x4xbf16>, vector<4x8xbf16>, vector<64x8xf32> -> vector<64x8xf32>
    %c0_51 = arith.constant 0 : index
    %c0_52 = arith.constant 0 : index
    %39 = vector.load %arg9[%c0_51, %c0_52] : memref<1x8xf32, #tpu.memory_space<vmem>>, vector<1x8xf32>
    %40 = vector.broadcast %39 : vector<1x8xf32> to vector<64x8xf32>
    %41 = arith.addf %38, %40 : vector<64x8xf32>
    %42 = arith.truncf %41 : vector<64x8xf32> to vector<64x8xbf16>
    %c0_53 = arith.constant 0 : index
    %c0_54 = arith.constant 0 : index
    %c0_55 = arith.constant 0 : index
    %43 = vector.load %arg11[%c0_53, %c0_54, %c0_55] : memref<1x64x8xbf16, #tpu.memory_space<vmem>>, vector<1x64x8xbf16>
    %44 = vector.shape_cast %43 : vector<1x64x8xbf16> to vector<64x8xbf16>
    %45 = vector.shape_cast %42 : vector<64x8xbf16> to vector<1x64x8xbf16>
    tpu.vector_store %arg11[%c0_53, %c0_54, %c0_55], %45 {strides = array<i32>} : memref<1x64x8xbf16, #tpu.memory_space<vmem>>, vector<1x64x8xbf16>,
    return
  }
  func.func @transform_0(%arg0: i32, %arg1: i32, %arg2: i32) -> (i32, i32, i32, i32) {
    %c0_i32 = arith.constant 0 : i32
    %c0_i32_0 = arith.constant 0 : i32
    %c0_i32_1 = arith.constant 0 : i32
    return %arg0, %arg1, %c0_i32, %c0_i32_0 : i32, i32, i32, i32
  }
  func.func @transform_1(%arg0: i32, %arg1: i32, %arg2: i32) -> (i32, i32, i32, i32) {
    %c4_i32 = arith.constant 4 : i32
    %0 = arith.muli %arg1, %c4_i32 : i32
    %c1_i32 = arith.constant 1 : i32
    %1 = arith.subi %0, %c1_i32 : i32
    %c0_i32 = arith.constant 0 : i32
    %2 = arith.maxsi %1, %c0_i32 : i32
    %c0_i32_0 = arith.constant 0 : i32
    %c0_i32_1 = arith.constant 0 : i32
    %c0_i32_2 = arith.constant 0 : i32
    return %arg0, %2, %c0_i32_0, %c0_i32_1 : i32, i32, i32, i32
  }
  func.func @transform_2(%arg0: i32, %arg1: i32, %arg2: i32) -> (i32, i32, i32, i32) {
    %c4_i32 = arith.constant 4 : i32
    %0 = arith.muli %arg1, %c4_i32 : i32
    %c4_i32_0 = arith.constant 4 : i32
    %1 = arith.addi %0, %c4_i32_0 : i32
    %c15_i32 = arith.constant 15 : i32
    %2 = arith.minsi %1, %c15_i32 : i32
    %c0_i32 = arith.constant 0 : i32
    %c0_i32_1 = arith.constant 0 : i32
    %c0_i32_2 = arith.constant 0 : i32
    return %arg0, %2, %c0_i32, %c0_i32_1 : i32, i32, i32, i32
  }
  func.func @transform_3(%arg0: i32, %arg1: i32, %arg2: i32) -> (i32, i32) {
    %c0_i32 = arith.constant 0 : i32
    %c0_i32_0 = arith.constant 0 : i32
    return %c0_i32, %arg2 : i32, i32
  }
  func.func @transform_4(%arg0: i32, %arg1: i32, %arg2: i32) -> (i32, i32) {
    %c0_i32 = arith.constant 0 : i32
    %c0_i32_0 = arith.constant 0 : i32
    return %c0_i32, %arg2 : i32, i32
  }
  func.func @transform_5(%arg0: i32, %arg1: i32, %arg2: i32) -> (i32, i32) {
    %c0_i32 = arith.constant 0 : i32
    %c0_i32_0 = arith.constant 0 : i32
    return %c0_i32, %arg2 : i32, i32
  }
  func.func @transform_6(%arg0: i32, %arg1: i32, %arg2: i32) -> (i32, i32) {
    %c0_i32 = arith.constant 0 : i32
    %c0_i32_0 = arith.constant 0 : i32
    return %c0_i32, %arg2 : i32, i32
  }
  func.func @transform_7(%arg0: i32, %arg1: i32, %arg2: i32) -> (i32, i32, i32) {
    %c0_i32 = arith.constant 0 : i32
    return %arg0, %arg1, %arg2 : i32, i32, i32
  }
  func.func @transform_8(%arg0: i32, %arg1: i32, %arg2: i32) -> (i32, i32, i32) {
    %c0_i32 = arith.constant 0 : i32
    return %arg0, %arg1, %arg2 : i32, i32, i32
  }
}

</mosaic_0001>

<llo_original>
// kernel: tpu_custom_call.1
$region0: #{tpu_custom_call.1}
  #allocation0 [shape = 'u32[]', space=smem, size = 0x4, offset = 0x4, fixed_abs, tag = 'smem constant byte address 0x4 - core index']
  #allocation1 [shape = 'u32[144,128]{1,0:T(1,128)}', space=vmem, size = 0x12000, scoped, tag = 'internal scratch']
  #allocation2 [shape = 'bf16[6,18,4]{2,1,0:T(8,128)(2,1)}', space=vmem, size = 0x9000, scoped, tag = 'scratch operand']
  %s0 = inlined_call_operand.vmem [shape: bf16[2,16,16,4], index: 0, kind: input, shape index: {}]
  %s1 = inlined_call_operand.vmem [shape: bf16[2,16,16,4], index: 1, kind: input, shape index: {}]
  %s2 = inlined_call_operand.vmem [shape: bf16[2,16,16,4], index: 2, kind: input, shape index: {}]
  %s3 = inlined_call_operand.vmem [shape: bf16[36,8], index: 3, kind: input, shape index: {}]
  %s4 = inlined_call_operand.vmem [shape: f32[1,8], index: 4, kind: input, shape index: {}]
  %s5 = inlined_call_operand.vmem [shape: bf16[4,8], index: 5, kind: input, shape index: {}]
  %s6 = inlined_call_operand.vmem [shape: f32[1,8], index: 6, kind: input, shape index: {}]
  %s7 = inlined_call_operand.vmem [shape: bf16[2,256,8], index: 7, kind: output, shape index: {0}]
  %s8 = inlined_call_operand.vmem [shape: bf16[2,256,8], index: 8, kind: output, shape index: {1}]
  %9 = xla_tuple %s7, %s8
  %s10 = sld [smem:[#allocation0]]
  $region77: #{tpu_custom_call.1} parent=0
    _
  %s12 = ssub.s32 1, %s10
  %s13 = scalar_select 0, %s12, %s10
  loop: start=0, step=1, limit=10
  $region2: #{tpu_custom_call.1} parent=0 // loop_pre_header
    _
  $region3: #{tpu_custom_call.1} parent=0 // loop_header
    %s15 = sphi 0, %s19
    %p16 = scmp.ge.s32.totalorder %s15, 10
    %s22 = sphi 0, %s41
    %s23 = sphi 0, %s37
    %s24 = sphi 0, %s33
    %s25 = sphi 0, %s22
    %s26 = sphi 0, %s23
    %s27 = sphi 0, %s24
    %s28 = sphi 0, %s25
    %s29 = sphi 0, %s26
    %s30 = sphi 0, %s27
    %s46 = sphi 0, %s48
    %s49 = sphi 0, %s46
    %s50 = sphi 0, %s49
    %s66 = sphi 0, %s50
    %s82 = sphi 0, %s84
    %s85 = sphi 0, %s82
    %s86 = sphi 0, %s85
    %s102 = sphi 0, %s86
    %s118 = sphi 0, %s120
    %s121 = sphi 0, %s118
    %s122 = sphi 0, %s121
    %s138 = sphi 0, %s122
    %s144 = sphi 0, %s146
    %s147 = sphi 0, %s144
    %s148 = sphi 0, %s147
    %s164 = sphi 0, %s148
    %s170 = sphi 0, %s172
    %s173 = sphi 0, %s170
    %s174 = sphi 0, %s173
    %s190 = sphi 0, %s174
    %s196 = sphi 0, %s198
    %s199 = sphi 0, %s196
    %s200 = sphi 0, %s199
    %s216 = sphi 0, %s200
    %s222 = sphi 0, %s224
    %s225 = sphi 0, %s222
    %s226 = sphi 0, %s225
    %s242 = sphi 0, %s226
    %s252 = sphi 0, %s254
    %s255 = sphi 0, %s252
    %s256 = sphi 0, %s255
    %s272 = sphi 0, %s256
    %s282 = sphi 0, %s284
    %s285 = sphi 0, %s282
    %s286 = sphi 0, %s285
    %s302 = sphi 0, %s286
  $region4: #{tpu_custom_call.1} parent=0 // loop_header_branch
    %18 = sbr.rel (%p16) target = $region8
  $region5: #{tpu_custom_call.1} parent=0 // loop_body
    %s20 = ssub.s32 %s15, 1
    %s21 = ssub.s32 %s15, 2
    %s31 = sadd.s32 1, %s24
    %p32 = scmp.ge.s32.totalorder %s31, 1
    %s33 = scalar_select %p32, 0, %s31
    %s34 = sadd.s32 1, %s23
    %s35 = scalar_select %p32, %s34, %s23
    %p36 = scmp.ge.s32.totalorder %s35, 4
    %s37 = scalar_select %p36, 0, %s35
    %s38 = sadd.s32 1, %s22
    %s39 = scalar_select %p36, %s38, %s22
    %p40 = scmp.ge.s32.totalorder %s39, 2
    %s41 = scalar_select %p40, 0, %s39
    %s42 = ssub.s32 %s22, %s41
    %s43 = ssub.s32 %s23, %s37
    %s44 = sor.u32 %s42, %s43
    %p45 = scmp.eq.s32.totalorder %s44, 0
    %s47 = sadd.s32 %s46, 1
    %s48 = scalar_select %p45, %s46, %s47
    %p51 = pneg %p45
    %p52 = scmp.eq.s32.totalorder %s15, 7
    %p53 = por %p51, %p52
    %p54 = scmp.ne.s32.totalorder %s46, %s49
    %p55 = scmp.eq.s32.totalorder %s15, 0
    %p56 = por %p54, %p55
    %p57 = scmp.ne.s32.totalorder %s46, %s49
    %p58 = scmp.eq.s32.totalorder %s20, 7
    %p59 = por %p57, %p58
    %p60 = scmp.ne.s32.totalorder %s49, %s50
    %p61 = scmp.eq.s32.totalorder %s20, 0
    %p62 = por %p60, %p61
    %p63 = scmp.ne.s32.totalorder %s49, %s50
    %p64 = scmp.eq.s32.totalorder %s21, 7
    %p65 = por %p63, %p64
    %p67 = scmp.ne.s32.totalorder %s50, %s66
    %p68 = scmp.eq.s32.totalorder %s21, 0
    %p69 = por %p67, %p68
    %s70 = smul.u32 %s23, 4
    %s71 = ssub.s32 %s70, 1
    %p72 = scmp.gt.s32.totalorder %s71, 0
    %s73 = scalar_select %p72, %s71, 0
    %s74 = smul.u32 %s37, 4
    %s75 = ssub.s32 %s74, 1
    %p76 = scmp.gt.s32.totalorder %s75, 0
    %s77 = scalar_select %p76, %s75, 0
    %s78 = ssub.s32 %s22, %s41
    %s79 = ssub.s32 %s73, %s77
    %s80 = sor.u32 %s78, %s79
    %p81 = scmp.eq.s32.totalorder %s80, 0
    %s83 = sadd.s32 %s82, 1
    %s84 = scalar_select %p81, %s82, %s83
    %p87 = pneg %p81
    %p88 = scmp.eq.s32.totalorder %s15, 7
    %p89 = por %p87, %p88
    %p90 = scmp.ne.s32.totalorder %s82, %s85
    %p91 = scmp.eq.s32.totalorder %s15, 0
    %p92 = por %p90, %p91
    %p93 = scmp.ne.s32.totalorder %s82, %s85
    %p94 = scmp.eq.s32.totalorder %s20, 7
    %p95 = por %p93, %p94
    %p96 = scmp.ne.s32.totalorder %s85, %s86
    %p97 = scmp.eq.s32.totalorder %s20, 0
    %p98 = por %p96, %p97
    %p99 = scmp.ne.s32.totalorder %s85, %s86
    %p100 = scmp.eq.s32.totalorder %s21, 7
    %p101 = por %p99, %p100
    %p103 = scmp.ne.s32.totalorder %s86, %s102
    %p104 = scmp.eq.s32.totalorder %s21, 0
    %p105 = por %p103, %p104
    %s106 = smul.u32 %s23, 4
    %s107 = sadd.s32 %s106, 4
    %p108 = scmp.lt.s32.totalorder %s107, 15
    %s109 = scalar_select %p108, %s107, 15
    %s110 = smul.u32 %s37, 4
    %s111 = sadd.s32 %s110, 4
    %p112 = scmp.lt.s32.totalorder %s111, 15
    %s113 = scalar_select %p112, %s111, 15
    %s114 = ssub.s32 %s22, %s41
    %s115 = ssub.s32 %s109, %s113
    %s116 = sor.u32 %s114, %s115
    %p117 = scmp.eq.s32.totalorder %s116, 0
    %s119 = sadd.s32 %s118, 1
    %s120 = scalar_select %p117, %s118, %s119
    %p123 = pneg %p117
    %p124 = scmp.eq.s32.totalorder %s15, 7
    %p125 = por %p123, %p124
    %p126 = scmp.ne.s32.totalorder %s118, %s121
    %p127 = scmp.eq.s32.totalorder %s15, 0
    %p128 = por %p126, %p127
    %p129 = scmp.ne.s32.totalorder %s118, %s121
    %p130 = scmp.eq.s32.totalorder %s20, 7
    %p131 = por %p129, %p130
    %p132 = scmp.ne.s32.totalorder %s121, %s122
    %p133 = scmp.eq.s32.totalorder %s20, 0
    %p134 = por %p132, %p133
    %p135 = scmp.ne.s32.totalorder %s121, %s122
    %p136 = scmp.eq.s32.totalorder %s21, 7
    %p137 = por %p135, %p136
    %p139 = scmp.ne.s32.totalorder %s122, %s138
    %p140 = scmp.eq.s32.totalorder %s21, 0
    %p141 = por %p139, %p140
    %s142 = ssub.s32 %s24, %s33
    %p143 = scmp.eq.s32.totalorder %s142, 0
    %s145 = sadd.s32 %s144, 1
    %s146 = scalar_select %p143, %s144, %s145
    %p149 = pneg %p143
    %p150 = scmp.eq.s32.totalorder %s15, 7
    %p151 = por %p149, %p150
    %p152 = scmp.ne.s32.totalorder %s144, %s147
    %p153 = scmp.eq.s32.totalorder %s15, 0
    %p154 = por %p152, %p153
    %p155 = scmp.ne.s32.totalorder %s144, %s147
    %p156 = scmp.eq.s32.totalorder %s20, 7
    %p157 = por %p155, %p156
    %p158 = scmp.ne.s32.totalorder %s147, %s148
    %p159 = scmp.eq.s32.totalorder %s20, 0
    %p160 = por %p158, %p159
    %p161 = scmp.ne.s32.totalorder %s147, %s148
    %p162 = scmp.eq.s32.totalorder %s21, 7
    %p163 = por %p161, %p162
    %p165 = scmp.ne.s32.totalorder %s148, %s164
    %p166 = scmp.eq.s32.totalorder %s21, 0
    %p167 = por %p165, %p166
    %s168 = ssub.s32 %s24, %s33
    %p169 = scmp.eq.s32.totalorder %s168, 0
    %s171 = sadd.s32 %s170, 1
    %s172 = scalar_select %p169, %s170, %s171
    %p175 = pneg %p169
    %p176 = scmp.eq.s32.totalorder %s15, 7
    %p177 = por %p175, %p176
    %p178 = scmp.ne.s32.totalorder %s170, %s173
    %p179 = scmp.eq.s32.totalorder %s15, 0
    %p180 = por %p178, %p179
    %p181 = scmp.ne.s32.totalorder %s170, %s173
    %p182 = scmp.eq.s32.totalorder %s20, 7
    %p183 = por %p181, %p182
    %p184 = scmp.ne.s32.totalorder %s173, %s174
    %p185 = scmp.eq.s32.totalorder %s20, 0
    %p186 = por %p184, %p185
    %p187 = scmp.ne.s32.totalorder %s173, %s174
    %p188 = scmp.eq.s32.totalorder %s21, 7
    %p189 = por %p187, %p188
    %p191 = scmp.ne.s32.totalorder %s174, %s190
    %p192 = scmp.eq.s32.totalorder %s21, 0
    %p193 = por %p191, %p192
    %s194 = ssub.s32 %s24, %s33
    %p195 = scmp.eq.s32.totalorder %s194, 0
    %s197 = sadd.s32 %s196, 1
    %s198 = scalar_select %p195, %s196, %s197
    %p201 = pneg %p195
    %p202 = scmp.eq.s32.totalorder %s15, 7
    %p203 = por %p201, %p202
    %p204 = scmp.ne.s32.totalorder %s196, %s199
    %p205 = scmp.eq.s32.totalorder %s15, 0
    %p206 = por %p204, %p205
    %p207 = scmp.ne.s32.totalorder %s196, %s199
    %p208 = scmp.eq.s32.totalorder %s20, 7
    %p209 = por %p207, %p208
    %p210 = scmp.ne.s32.totalorder %s199, %s200
    %p211 = scmp.eq.s32.totalorder %s20, 0
    %p212 = por %p210, %p211
    %p213 = scmp.ne.s32.totalorder %s199, %s200
    %p214 = scmp.eq.s32.totalorder %s21, 7
    %p215 = por %p213, %p214
    %p217 = scmp.ne.s32.totalorder %s200, %s216
    %p218 = scmp.eq.s32.totalorder %s21, 0
    %p219 = por %p217, %p218
    %s220 = ssub.s32 %s24, %s33
    %p221 = scmp.eq.s32.totalorder %s220, 0
    %s223 = sadd.s32 %s222, 1
    %s224 = scalar_select %p221, %s222, %s223
    %p227 = pneg %p221
    %p228 = scmp.eq.s32.totalorder %s15, 7
    %p229 = por %p227, %p228
    %p230 = scmp.ne.s32.totalorder %s222, %s225
    %p231 = scmp.eq.s32.totalorder %s15, 0
    %p232 = por %p230, %p231
    %p233 = scmp.ne.s32.totalorder %s222, %s225
    %p234 = scmp.eq.s32.totalorder %s20, 7
    %p235 = por %p233, %p234
    %p236 = scmp.ne.s32.totalorder %s225, %s226
    %p237 = scmp.eq.s32.totalorder %s20, 0
    %p238 = por %p236, %p237
    %p239 = scmp.ne.s32.totalorder %s225, %s226
    %p240 = scmp.eq.s32.totalorder %s21, 7
    %p241 = por %p239, %p240
    %p243 = scmp.ne.s32.totalorder %s226, %s242
    %p244 = scmp.eq.s32.totalorder %s21, 0
    %p245 = por %p243, %p244
    %s246 = ssub.s32 %s22, %s41
    %s247 = ssub.s32 %s23, %s37
    %s248 = sor.u32 %s246, %s247
    %s249 = ssub.s32 %s24, %s33
    %s250 = sor.u32 %s248, %s249
    %p251 = scmp.eq.s32.totalorder %s250, 0
    %s253 = sadd.s32 %s252, 1
    %s254 = scalar_select %p251, %s252, %s253
    %p257 = pneg %p251
    %p258 = scmp.eq.s32.totalorder %s15, 7
    %p259 = por %p257, %p258
    %p260 = scmp.ne.s32.totalorder %s252, %s255
    %p261 = scmp.eq.s32.totalorder %s15, 0
    %p262 = por %p260, %p261
    %p263 = scmp.ne.s32.totalorder %s252, %s255
    %p264 = scmp.eq.s32.totalorder %s20, 7
    %p265 = por %p263, %p264
    %p266 = scmp.ne.s32.totalorder %s255, %s256
    %p267 = scmp.eq.s32.totalorder %s20, 0
    %p268 = por %p266, %p267
    %p269 = scmp.ne.s32.totalorder %s255, %s256
    %p270 = scmp.eq.s32.totalorder %s21, 7
    %p271 = por %p269, %p270
    %p273 = scmp.ne.s32.totalorder %s256, %s272
    %p274 = scmp.eq.s32.totalorder %s21, 0
    %p275 = por %p273, %p274
    %s276 = ssub.s32 %s22, %s41
    %s277 = ssub.s32 %s23, %s37
    %s278 = sor.u32 %s276, %s277
    %s279 = ssub.s32 %s24, %s33
    %s280 = sor.u32 %s278, %s279
    %p281 = scmp.eq.s32.totalorder %s280, 0
    %s283 = sadd.s32 %s282, 1
    %s284 = scalar_select %p281, %s282, %s283
    %p287 = pneg %p281
    %p288 = scmp.eq.s32.totalorder %s15, 7
    %p289 = por %p287, %p288
    %p290 = scmp.ne.s32.totalorder %s282, %s285
    %p291 = scmp.eq.s32.totalorder %s15, 0
    %p292 = por %p290, %p291
    %p293 = scmp.ne.s32.totalorder %s282, %s285
    %p294 = scmp.eq.s32.totalorder %s20, 7
    %p295 = por %p293, %p294
    %p296 = scmp.ne.s32.totalorder %s285, %s286
    %p297 = scmp.eq.s32.totalorder %s20, 0
    %p298 = por %p296, %p297
    %p299 = scmp.ne.s32.totalorder %s285, %s286
    %p300 = scmp.eq.s32.totalorder %s21, 7
    %p301 = por %p299, %p300
    %p303 = scmp.ne.s32.totalorder %s286, %s302
    %p304 = scmp.eq.s32.totalorder %s21, 0
    %p305 = por %p303, %p304
    %p306 = scmp.le.s32.totalorder 1, %s15
    %p307 = scmp.lt.s32.totalorder %s15, 9
    %p308 = pnand %p306, %p307
    %p309 = pneg %p308
    // Predicated region
    $region9: #{tpu_custom_call.1} parent=5 // pred_check
      _
    $region10: #{tpu_custom_call.1} parent=5 // pred_check_branch
      %311 = sbr.rel (%p308) target = $region12
    $region11: #{tpu_custom_call.1} parent=5 // pred_region
      %s312 = ssub.s32 %s15, 1
      // Predicated region
      $region13: #{tpu_custom_call.1} parent=11 // pred_check
        %p313 = pneg %p160
      $region14: #{tpu_custom_call.1} parent=11 // pred_check_branch
        %315 = sbr.rel (%p313) target = $region16
      $region15: #{tpu_custom_call.1} parent=11 // pred_region
        %p316 = scmp.lt.s32.totalorder %s27, 0
        %s317 = scalar_select %p316, %s27, 0
        %s318 = smul.addr %s317, 4
        %s319 = scalar_lea.vmem %s3, %s318
      $region16: #{tpu_custom_call.1} parent=11 // pred_fallthru
        _
      // Predicated region
      $region17: #{tpu_custom_call.1} parent=11 // pred_check
        %p320 = pneg %p186
      $region18: #{tpu_custom_call.1} parent=11 // pred_check_branch
        %322 = sbr.rel (%p320) target = $region20
      $region19: #{tpu_custom_call.1} parent=11 // pred_region
        %p323 = scmp.lt.s32.totalorder %s27, 0
        %s324 = scalar_select %p323, %s27, 0
        %s325 = scalar_lea.vmem %s4, %s324
      $region20: #{tpu_custom_call.1} parent=11 // pred_fallthru
        _
      // Predicated region
      $region21: #{tpu_custom_call.1} parent=11 // pred_check
        %p326 = pneg %p212
      $region22: #{tpu_custom_call.1} parent=11 // pred_check_branch
        %328 = sbr.rel (%p326) target = $region24
      $region23: #{tpu_custom_call.1} parent=11 // pred_region
        %p329 = scmp.lt.s32.totalorder %s27, 0
        %s330 = scalar_select %p329, %s27, 0
        %s331 = smul.addr %s330, 2
        %s332 = scalar_lea.vmem %s5, %s331
      $region24: #{tpu_custom_call.1} parent=11 // pred_fallthru
        _
      // Predicated region
      $region25: #{tpu_custom_call.1} parent=11 // pred_check
        %p333 = pneg %p238
      $region26: #{tpu_custom_call.1} parent=11 // pred_check_branch
        %335 = sbr.rel (%p333) target = $region28
      $region27: #{tpu_custom_call.1} parent=11 // pred_region
        %p336 = scmp.lt.s32.totalorder %s27, 0
        %s337 = scalar_select %p336, %s27, 0
        %s338 = scalar_lea.vmem %s6, %s337
      $region28: #{tpu_custom_call.1} parent=11 // pred_fallthru
        _
    $region12: #{tpu_custom_call.1} parent=5 // pred_fallthru
      _
    %p339 = scmp.lt.s32.totalorder %s15, 8
    // Predicated region
    $region29: #{tpu_custom_call.1} parent=5 // pred_check
      %p340 = pneg %p339
    $region30: #{tpu_custom_call.1} parent=5 // pred_check_branch
      %342 = sbr.rel (%p340) target = $region32
    $region31: #{tpu_custom_call.1} parent=5 // pred_region
      // Predicated region
      $region33: #{tpu_custom_call.1} parent=31 // pred_check
        %p343 = pneg %p56
      $region34: #{tpu_custom_call.1} parent=31 // pred_check_branch
        %345 = sbr.rel (%p343) target = $region36
      $region35: #{tpu_custom_call.1} parent=31 // pred_region
        %s346 = smul.u32 4, %s23
        %p347 = scmp.lt.s32.totalorder %s22, 1
        %s348 = scalar_select %p347, %s22, 1
        %p349 = scmp.lt.s32.totalorder %s346, 15
        %s350 = scalar_select %p349, %s346, 15
        %s351 = smul.addr %s350, 2
        %s352 = smul.addr %s348, 32
        %s353 = sadd.s32 %s351, %s352
        %s354 = smul.addr %s353, 4
        %s355 = scalar_lea.vmem %s0, %s354
        %s356 = smul.u32 4, %s23
      $region36: #{tpu_custom_call.1} parent=31 // pred_fallthru
        _
      // Predicated region
      $region37: #{tpu_custom_call.1} parent=31 // pred_check
        %p357 = pneg %p92
      $region38: #{tpu_custom_call.1} parent=31 // pred_check_branch
        %359 = sbr.rel (%p357) target = $region40
      $region39: #{tpu_custom_call.1} parent=31 // pred_region
        %s360 = smul.u32 %s23, 4
        %s361 = ssub.s32 %s360, 1
        %p362 = scmp.gt.s32.totalorder %s361, 0
        %s363 = scalar_select %p362, %s361, 0
        %p364 = scmp.lt.s32.totalorder %s22, 1
        %s365 = scalar_select %p364, %s22, 1
        %p366 = scmp.lt.s32.totalorder %s363, 15
        %s367 = scalar_select %p366, %s363, 15
        %s368 = smul.addr %s367, 2
        %s369 = smul.addr %s365, 32
        %s370 = sadd.s32 %s368, %s369
        %s371 = smul.addr %s370, 4
        %s372 = scalar_lea.vmem %s1, %s371
        %s373 = smul.u32 %s23, 4
        %s374 = ssub.s32 %s373, 1
        %p375 = scmp.gt.s32.totalorder %s374, 0
        %s376 = scalar_select %p375, %s374, 0
      $region40: #{tpu_custom_call.1} parent=31 // pred_fallthru
        _
      // Predicated region
      $region41: #{tpu_custom_call.1} parent=31 // pred_check
        %p377 = pneg %p128
      $region42: #{tpu_custom_call.1} parent=31 // pred_check_branch
        %379 = sbr.rel (%p377) target = $region44
      $region43: #{tpu_custom_call.1} parent=31 // pred_region
        %s380 = smul.u32 %s23, 4
        %s381 = sadd.s32 %s380, 4
        %p382 = scmp.lt.s32.totalorder %s381, 15
        %s383 = scalar_select %p382, %s381, 15
        %p384 = scmp.lt.s32.totalorder %s22, 1
        %s385 = scalar_select %p384, %s22, 1
        %p386 = scmp.lt.s32.totalorder %s383, 15
        %s387 = scalar_select %p386, %s383, 15
        %s388 = smul.addr %s387, 2
        %s389 = smul.addr %s385, 32
        %s390 = sadd.s32 %s388, %s389
        %s391 = smul.addr %s390, 4
        %s392 = scalar_lea.vmem %s2, %s391
        %s393 = smul.u32 %s23, 4
        %s394 = sadd.s32 %s393, 4
        %p395 = scmp.lt.s32.totalorder %s394, 15
        %s396 = scalar_select %p395, %s394, 15
      $region44: #{tpu_custom_call.1} parent=31 // pred_fallthru
        _
    $region32: #{tpu_custom_call.1} parent=5 // pred_fallthru
      _
    %p397 = scmp.le.s32.totalorder 1, %s15
    %p398 = scmp.lt.s32.totalorder %s15, 9
    %p399 = pnand %p397, %p398
    %p400 = pneg %p399
    // Predicated region
    $region45: #{tpu_custom_call.1} parent=5 // pred_check
      _
    $region46: #{tpu_custom_call.1} parent=5 // pred_check_branch
      %402 = sbr.rel (%p399) target = $region48
    $region47: #{tpu_custom_call.1} parent=5 // pred_region
      %s403 = ssub.s32 %s15, 1
      %s404 = smul.u32 4, %s26
      %p405 = scmp.lt.s32.totalorder %s25, 1
      %s406 = scalar_select %p405, %s25, 1
      %p407 = scmp.lt.s32.totalorder %s404, 15
      %s408 = scalar_select %p407, %s404, 15
      %s409 = smul.addr %s408, 2
      %s410 = smul.addr %s406, 32
      %s411 = sadd.s32 %s409, %s410
      %s412 = smul.addr %s411, 4
      %s413 = scalar_lea.vmem %s0, %s412
      %p414 = pneg %p62
      %p415 = pneg %p59
      %s416 = smul.u32 %s26, 4
      %s417 = ssub.s32 %s416, 1
      %p418 = scmp.gt.s32.totalorder %s417, 0
      %s419 = scalar_select %p418, %s417, 0
      %p420 = scmp.lt.s32.totalorder %s25, 1
      %s421 = scalar_select %p420, %s25, 1
      %p422 = scmp.lt.s32.totalorder %s419, 15
      %s423 = scalar_select %p422, %s419, 15
      %s424 = smul.addr %s423, 2
      %s425 = smul.addr %s421, 32
      %s426 = sadd.s32 %s424, %s425
      %s427 = smul.addr %s426, 4
      %s428 = scalar_lea.vmem %s1, %s427
      %p429 = pneg %p98
      %p430 = pneg %p95
      %s431 = smul.u32 %s26, 4
      %s432 = sadd.s32 %s431, 4
      %p433 = scmp.lt.s32.totalorder %s432, 15
      %s434 = scalar_select %p433, %s432, 15
      %p435 = scmp.lt.s32.totalorder %s25, 1
      %s436 = scalar_select %p435, %s25, 1
      %p437 = scmp.lt.s32.totalorder %s434, 15
      %s438 = scalar_select %p437, %s434, 15
      %s439 = smul.addr %s438, 2
      %s440 = smul.addr %s436, 32
      %s441 = sadd.s32 %s439, %s440
      %s442 = smul.addr %s441, 4
      %s443 = scalar_lea.vmem %s2, %s442
      %p444 = pneg %p134
      %p445 = pneg %p131
      %p446 = scmp.lt.s32.totalorder %s27, 0
      %s447 = scalar_select %p446, %s27, 0
      %s448 = smul.addr %s447, 4
      %s449 = scalar_lea.vmem %s3, %s448
      %p450 = pneg %p160
      %p451 = pneg %p157
      %p452 = scmp.lt.s32.totalorder %s27, 0
      %s453 = scalar_select %p452, %s27, 0
      %s454 = scalar_lea.vmem %s4, %s453
      %p455 = pneg %p186
      %p456 = pneg %p183
      %p457 = scmp.lt.s32.totalorder %s27, 0
      %s458 = scalar_select %p457, %s27, 0
      %s459 = smul.addr %s458, 2
      %s460 = scalar_lea.vmem %s5, %s459
      %p461 = pneg %p212
      %p462 = pneg %p209
      %p463 = scmp.lt.s32.totalorder %s27, 0
      %s464 = scalar_select %p463, %s27, 0
      %s465 = scalar_lea.vmem %s6, %s464
      %p466 = pneg %p238
      %p467 = pneg %p235
      %p468 = pneg %p268
      %p469 = pneg %p265
      %s470 = smul.u32 8, %s26
      %p471 = scmp.lt.s32.totalorder %s25, 1
      %s472 = scalar_select %p471, %s25, 1
      %p473 = scmp.lt.s32.totalorder %s470, 31
      %s474 = scalar_select %p473, %s470, 31
      %p475 = scmp.lt.s32.totalorder %s27, 0
      %s476 = scalar_select %p475, %s27, 0
      %s477 = sadd.s32 %s476, %s474
      %s478 = smul.addr %s472, 32
      %s479 = sadd.s32 %s477, %s478
      %s480 = smul.addr %s479, 4
      %s481 = scalar_lea.vmem %s7, %s480
      %p482 = pneg %p298
      %p483 = pneg %p295
      %s484 = smul.u32 8, %s26
      %p485 = scmp.lt.s32.totalorder %s25, 1
      %s486 = scalar_select %p485, %s25, 1
      %p487 = scmp.lt.s32.totalorder %s484, 31
      %s488 = scalar_select %p487, %s484, 31
      %p489 = scmp.lt.s32.totalorder %s27, 0
      %s490 = scalar_select %p489, %s27, 0
      %s491 = sadd.s32 %s490, %s488
      %s492 = smul.addr %s486, 32
      %s493 = sadd.s32 %s491, %s492
      %s494 = smul.addr %s493, 4
      %s495 = scalar_lea.vmem %s8, %s494
      %s496 = smul.u32 4, %s26
      %p497 = scmp.lt.s32.totalorder %s25, 1
      %s498 = scalar_select %p497, %s25, 1
      %p499 = scmp.lt.s32.totalorder %s496, 15
      %s500 = scalar_select %p499, %s496, 15
      %s501 = smul.addr %s500, 2
      %s502 = smul.addr %s498, 32
      %s503 = sadd.s32 %s501, %s502
      %s504 = smul.addr %s503, 4
      %s505 = scalar_lea.vmem %s0, %s504
      %s506 = smul.u32 4, %s26
      %s507 = smul.u32 %s26, 4
      %s508 = ssub.s32 %s507, 1
      %p509 = scmp.gt.s32.totalorder %s508, 0
      %s510 = scalar_select %p509, %s508, 0
      %p511 = scmp.lt.s32.totalorder %s25, 1
      %s512 = scalar_select %p511, %s25, 1
      %p513 = scmp.lt.s32.totalorder %s510, 15
      %s514 = scalar_select %p513, %s510, 15
      %s515 = smul.addr %s514, 2
      %s516 = smul.addr %s512, 32
      %s517 = sadd.s32 %s515, %s516
      %s518 = smul.addr %s517, 4
      %s519 = scalar_lea.vmem %s1, %s518
      %s520 = smul.u32 %s26, 4
      %s521 = ssub.s32 %s520, 1
      %p522 = scmp.gt.s32.totalorder %s521, 0
      %s523 = scalar_select %p522, %s521, 0
      %s524 = smul.u32 %s26, 4
      %s525 = sadd.s32 %s524, 4
      %p526 = scmp.lt.s32.totalorder %s525, 15
      %s527 = scalar_select %p526, %s525, 15
      %p528 = scmp.lt.s32.totalorder %s25, 1
      %s529 = scalar_select %p528, %s25, 1
      %p530 = scmp.lt.s32.totalorder %s527, 15
      %s531 = scalar_select %p530, %s527, 15
      %s532 = smul.addr %s531, 2
      %s533 = smul.addr %s529, 32
      %s534 = sadd.s32 %s532, %s533
      %s535 = smul.addr %s534, 4
      %s536 = scalar_lea.vmem %s2, %s535
      %s537 = smul.u32 %s26, 4
      %s538 = sadd.s32 %s537, 4
      %p539 = scmp.lt.s32.totalorder %s538, 15
      %s540 = scalar_select %p539, %s538, 15
      %p541 = scmp.lt.s32.totalorder %s27, 0
      %s542 = scalar_select %p541, %s27, 0
      %s543 = smul.addr %s542, 4
      %s544 = scalar_lea.vmem %s3, %s543
      %p545 = scmp.lt.s32.totalorder %s27, 0
      %s546 = scalar_select %p545, %s27, 0
      %s547 = scalar_lea.vmem %s4, %s546
      %p548 = scmp.lt.s32.totalorder %s27, 0
      %s549 = scalar_select %p548, %s27, 0
      %s550 = smul.addr %s549, 2
      %s551 = scalar_lea.vmem %s5, %s550
      %p552 = scmp.lt.s32.totalorder %s27, 0
      %s553 = scalar_select %p552, %s27, 0
      %s554 = scalar_lea.vmem %s6, %s553
      %s555 = smul.u32 8, %s26
      %p556 = scmp.lt.s32.totalorder %s25, 1
      %s557 = scalar_select %p556, %s25, 1
      %p558 = scmp.lt.s32.totalorder %s555, 31
      %s559 = scalar_select %p558, %s555, 31
      %p560 = scmp.lt.s32.totalorder %s27, 0
      %s561 = scalar_select %p560, %s27, 0
      %s562 = sadd.s32 %s561, %s559
      %s563 = smul.addr %s557, 32
      %s564 = sadd.s32 %s562, %s563
      %s565 = smul.addr %s564, 4
      %s566 = scalar_lea.vmem %s7, %s565
      %s567 = smul.u32 8, %s26
      %s568 = smul.u32 8, %s26
      %p569 = scmp.lt.s32.totalorder %s25, 1
      %s570 = scalar_select %p569, %s25, 1
      %p571 = scmp.lt.s32.totalorder %s568, 31
      %s572 = scalar_select %p571, %s568, 31
      %p573 = scmp.lt.s32.totalorder %s27, 0
      %s574 = scalar_select %p573, %s27, 0
      %s575 = sadd.s32 %s574, %s572
      %s576 = smul.addr %s570, 32
      %s577 = sadd.s32 %s575, %s576
      %s578 = smul.addr %s577, 4
      %s579 = scalar_lea.vmem %s8, %s578
      %s580 = smul.u32 8, %s26
      %vm582 = vcmask 27648
      %583 = vst.msk [vmem:[#allocation2] sm:$0xf] %vm582, 0
      %584 = vst.msk [vmem:[#allocation2 + $0x4] sm:$0xf] %vm582, 0
      %vm585 = vcmask 24576
      %586 = vst.msk [vmem:[#allocation2 + $0x8] sm:$0x1] %vm585, 0
      %587 = vst.msk [vmem:[#allocation2 + $0xc] sm:$0xf] %vm582, 0
      %588 = vst.msk [vmem:[#allocation2 + $0x10] sm:$0xf] %vm582, 0
      %589 = vst.msk [vmem:[#allocation2 + $0x14] sm:$0x1] %vm585, 0
      %590 = vst.msk [vmem:[#allocation2 + $0x18] sm:$0xf] %vm582, 0
      %591 = vst.msk [vmem:[#allocation2 + $0x1c] sm:$0xf] %vm582, 0
      %592 = vst.msk [vmem:[#allocation2 + $0x20] sm:$0x1] %vm585, 0
      %593 = vst.msk [vmem:[#allocation2 + $0x24] sm:$0xf] %vm582, 0
      %594 = vst.msk [vmem:[#allocation2 + $0x28] sm:$0xf] %vm582, 0
      %595 = vst.msk [vmem:[#allocation2 + $0x2c] sm:$0x1] %vm585, 0
      %596 = vst.msk [vmem:[#allocation2 + $0x30] sm:$0xf] %vm582, 0
      %597 = vst.msk [vmem:[#allocation2 + $0x34] sm:$0xf] %vm582, 0
      %598 = vst.msk [vmem:[#allocation2 + $0x38] sm:$0x1] %vm585, 0
      %599 = vst.msk [vmem:[#allocation2 + $0x3c] sm:$0xf] %vm582, 0
      %600 = vst.msk [vmem:[#allocation2 + $0x40] sm:$0xf] %vm582, 0
      %601 = vst.msk [vmem:[#allocation2 + $0x44] sm:$0x1] %vm585, 0
      %v602 = vld [vmem:[%s505] sm:$0xf]
      %v603 = vld [vmem:[%s505 + $0x4] sm:$0xf]
      %v604 = vld [vmem:[%s505 + $0x8] sm:$0xf]
      %v605 = vld [vmem:[%s505 + $0xc] sm:$0xf]
      %v606 = vld [vmem:[%s505 + $0x10] sm:$0xf]
      %v607 = vld [vmem:[%s505 + $0x14] sm:$0xf]
      %v608 = vld [vmem:[%s505 + $0x18] sm:$0xf]
      %v609 = vld [vmem:[%s505 + $0x1c] sm:$0xf]
      %vm610 = vsmask.f32 256
      %vm611 = vsmask.f32 4368
      %vm612 = vmor %vm610, %vm611
      %v614 = vshrl.u32 %v602, 16
      %v616 = vrot.slane %v614, 7
      %v617 = vshll.u32 %v602, 16
      %v619 = vor.u32 %v616, %v617
      %v620 = vrot.slane %v616, 4
      %v622 = vshrl.u32 %v603, 16
      %v624 = vrot.slane %v622, 7
      %v625 = vshll.u32 %v603, 16
      %v627 = vor.u32 %v624, %v625
      %v628 = vsel %vm612, %v620, %v627
      %v629 = vrot.slane %v624, 4
      %v631 = vshrl.u32 %v604, 16
      %v633 = vrot.slane %v631, 7
      %v634 = vshll.u32 %v604, 16
      %v636 = vor.u32 %v633, %v634
      %v637 = vrot.slane %v633, 4
      %v639 = vshrl.u32 %v605, 16
      %v641 = vrot.slane %v639, 7
      %v642 = vshll.u32 %v605, 16
      %v644 = vor.u32 %v641, %v642
      %v645 = vsel %vm612, %v637, %v644
      %v646 = vrot.slane %v641, 4
      %v648 = vshrl.u32 %v606, 16
      %v650 = vrot.slane %v648, 7
      %v651 = vshll.u32 %v606, 16
      %v653 = vor.u32 %v650, %v651
      %v654 = vrot.slane %v650, 4
      %v656 = vshrl.u32 %v607, 16
      %v658 = vrot.slane %v656, 7
      %v659 = vshll.u32 %v607, 16
      %v661 = vor.u32 %v658, %v659
      %v662 = vsel %vm612, %v654, %v661
      %v663 = vrot.slane %v658, 4
      %v665 = vshrl.u32 %v608, 16
      %v667 = vrot.slane %v665, 7
      %v668 = vshll.u32 %v608, 16
      %v670 = vor.u32 %v667, %v668
      %v671 = vrot.slane %v667, 4
      %v673 = vshrl.u32 %v609, 16
      %v675 = vrot.slane %v673, 7
      %v676 = vshll.u32 %v609, 16
      %v678 = vor.u32 %v675, %v676
      %v679 = vsel %vm612, %v671, %v678
      %v680 = vrot.slane %v675, 4
      %s693 = scalar_lea.vmem [#allocation2], 12
      %vm694 = vcmask 27648
      %vm695 = vsmask.f32 7938
      %vm696 = vmand %vm694, %vm695
      %v697 = vld [vmem:[%s693] sm:$0xf]
      %v698 = vsel %vm696, %v619, %v697
      %699 = vst [vmem:[%s693] sm:$0xf] %v698
      %700 = vst.msk [vmem:[%s693 + $0x4] sm:$0xf] %vm582, %v628
      %vm701 = vcmask 24576
      %vm702 = vmand %vm701, %vm610
      %v703 = vld [vmem:[%s693 + $0x8] sm:$0x1]
      %v704 = vsel %vm702, %v629, %v703
      %705 = vst [vmem:[%s693 + $0x8] sm:$0x1] %v704
      %v706 = vld [vmem:[%s693 + $0xc] sm:$0xf]
      %v707 = vsel %vm696, %v636, %v706
      %708 = vst [vmem:[%s693 + $0xc] sm:$0xf] %v707
      %709 = vst.msk [vmem:[%s693 + $0x10] sm:$0xf] %vm582, %v645
      %v710 = vld [vmem:[%s693 + $0x14] sm:$0x1]
      %v711 = vsel %vm702, %v646, %v710
      %712 = vst [vmem:[%s693 + $0x14] sm:$0x1] %v711
      %v713 = vld [vmem:[%s693 + $0x18] sm:$0xf]
      %v714 = vsel %vm696, %v653, %v713
      %715 = vst [vmem:[%s693 + $0x18] sm:$0xf] %v714
      %716 = vst.msk [vmem:[%s693 + $0x1c] sm:$0xf] %vm582, %v662
      %v717 = vld [vmem:[%s693 + $0x20] sm:$0x1]
      %v718 = vsel %vm702, %v663, %v717
      %719 = vst [vmem:[%s693 + $0x20] sm:$0x1] %v718
      %v720 = vld [vmem:[%s693 + $0x24] sm:$0xf]
      %v721 = vsel %vm696, %v670, %v720
      %722 = vst [vmem:[%s693 + $0x24] sm:$0xf] %v721
      %723 = vst.msk [vmem:[%s693 + $0x28] sm:$0xf] %vm582, %v679
      %v724 = vld [vmem:[%s693 + $0x2c] sm:$0x1]
      %v725 = vsel %vm702, %v680, %v724
      %726 = vst [vmem:[%s693 + $0x2c] sm:$0x1] %v725
      %p727 = scmp.gt.s32.totalorder %s26, 0
      // Predicated region
      $region49: #{tpu_custom_call.1} parent=47 // pred_check
        %p728 = pneg %p727
      $region50: #{tpu_custom_call.1} parent=47 // pred_check_branch
        %730 = sbr.rel (%p728) target = $region52
      $region51: #{tpu_custom_call.1} parent=47 // pred_region
        %v731 = vld [vmem:[%s519] sm:$0xf]
        %v732 = vld [vmem:[%s519 + $0x4] sm:$0xf]
        %v734 = vshrl.u32 %v731, 16
        %v736 = vrot.slane %v734, 7
        %v737 = vshll.u32 %v731, 16
        %v739 = vor.u32 %v736, %v737
        %v740 = vrot.slane %v736, 4
        %v742 = vshrl.u32 %v732, 16
        %v744 = vrot.slane %v742, 7
        %v745 = vshll.u32 %v732, 16
        %v747 = vor.u32 %v744, %v745
        %v748 = vsel %vm612, %v740, %v747
        %v749 = vrot.slane %v744, 4
        %v753 = vld [vmem:[#allocation2] sm:$0xf]
        %v754 = vsel %vm696, %v739, %v753
        %755 = vst [vmem:[#allocation2] sm:$0xf] %v754
        %756 = vst.msk [vmem:[#allocation2 + $0x4] sm:$0xf] %vm582, %v748
        %v757 = vld [vmem:[#allocation2 + $0x8] sm:$0x1]
        %v758 = vsel %vm702, %v749, %v757
        %759 = vst [vmem:[#allocation2 + $0x8] sm:$0x1] %v758
      $region52: #{tpu_custom_call.1} parent=47 // pred_fallthru
        _
      %s760 = sadd.s32 %s26, 1
      %s761 = smul.u32 %s760, 4
      %p762 = scmp.lt.s32.totalorder %s761, 16
      // Predicated region
      $region53: #{tpu_custom_call.1} parent=47 // pred_check
        %p763 = pneg %p762
      $region54: #{tpu_custom_call.1} parent=47 // pred_check_branch
        %765 = sbr.rel (%p763) target = $region56
      $region55: #{tpu_custom_call.1} parent=47 // pred_region
        %v766 = vld [vmem:[%s536] sm:$0xf]
        %v767 = vld [vmem:[%s536 + $0x4] sm:$0xf]
        %v769 = vshrl.u32 %v766, 16
        %v771 = vrot.slane %v769, 7
        %v772 = vshll.u32 %v766, 16
        %v774 = vor.u32 %v771, %v772
        %v775 = vrot.slane %v771, 4
        %v777 = vshrl.u32 %v767, 16
        %v779 = vrot.slane %v777, 7
        %v780 = vshll.u32 %v767, 16
        %v782 = vor.u32 %v779, %v780
        %v783 = vsel %vm612, %v775, %v782
        %v784 = vrot.slane %v779, 4
        %s788 = scalar_lea.vmem [#allocation2], 60
        %v789 = vld [vmem:[%s788] sm:$0xf]
        %v790 = vsel %vm696, %v774, %v789
        %791 = vst [vmem:[%s788] sm:$0xf] %v790
        %792 = vst.msk [vmem:[%s788 + $0x4] sm:$0xf] %vm582, %v783
        %v793 = vld [vmem:[%s788 + $0x8] sm:$0x1]
        %v794 = vsel %vm702, %v784, %v793
        %795 = vst [vmem:[%s788 + $0x8] sm:$0x1] %v794
      $region56: #{tpu_custom_call.1} parent=47 // pred_fallthru
        _
      %v796 = vld [vmem:[#allocation2] sm:$0xf]
      %v797 = vld [vmem:[#allocation2 + $0x4] sm:$0xf]
      %v798 = vld [vmem:[#allocation2 + $0xc] sm:$0xf]
      %v799 = vld [vmem:[#allocation2 + $0x10] sm:$0xf]
      %v800 = vld [vmem:[#allocation2 + $0x18] sm:$0xf]
      %v801 = vld [vmem:[#allocation2 + $0x1c] sm:$0xf]
      %v802 = vld [vmem:[#allocation2 + $0x24] sm:$0xf]
      %v803 = vld [vmem:[#allocation2 + $0x28] sm:$0xf]
      %v804 = vld [vmem:[#allocation2 + $0x8] sm:$0x1]
      %v805 = vld [vmem:[#allocation2 + $0x14] sm:$0x1]
      %v806 = vld [vmem:[#allocation2 + $0x20] sm:$0x1]
      %v807 = vld [vmem:[#allocation2 + $0x2c] sm:$0x1]
      %v808 = vld [vmem:[#allocation2] sm:$0xe]
      %v809 = vld [vmem:[#allocation2 + $0xc] sm:$0xe]
      %v810 = vld [vmem:[#allocation2 + $0x18] sm:$0xe]
      %v811 = vld [vmem:[#allocation2 + $0x24] sm:$0xe]
      %v812 = vld [vmem:[%s693] sm:$0xf]
      %v813 = vld [vmem:[%s693 + $0x4] sm:$0xf]
      %v814 = vld [vmem:[%s693 + $0xc] sm:$0xf]
      %v815 = vld [vmem:[%s693 + $0x10] sm:$0xf]
      %v816 = vld [vmem:[%s693 + $0x18] sm:$0xf]
      %v817 = vld [vmem:[%s693 + $0x1c] sm:$0xf]
      %v818 = vld [vmem:[%s693 + $0x24] sm:$0xf]
      %v819 = vld [vmem:[%s693 + $0x28] sm:$0xf]
      %v820 = vld [vmem:[%s693 + $0x8] sm:$0x1]
      %v821 = vld [vmem:[%s693 + $0x14] sm:$0x1]
      %v822 = vld [vmem:[%s693 + $0x20] sm:$0x1]
      %v823 = vld [vmem:[%s693 + $0x2c] sm:$0x1]
      %v824 = vld [vmem:[%s693] sm:$0xe]
      %v825 = vld [vmem:[%s693 + $0xc] sm:$0xe]
      %v826 = vld [vmem:[%s693 + $0x18] sm:$0xe]
      %v827 = vld [vmem:[%s693 + $0x24] sm:$0xe]
      %s828 = scalar_lea.vmem [#allocation2], 24
      %v829 = vld [vmem:[%s828] sm:$0xf]
      %v830 = vld [vmem:[%s828 + $0x4] sm:$0xf]
      %v831 = vld [vmem:[%s828 + $0xc] sm:$0xf]
      %v832 = vld [vmem:[%s828 + $0x10] sm:$0xf]
      %v833 = vld [vmem:[%s828 + $0x18] sm:$0xf]
      %v834 = vld [vmem:[%s828 + $0x1c] sm:$0xf]
      %v835 = vld [vmem:[%s828 + $0x24] sm:$0xf]
      %v836 = vld [vmem:[%s828 + $0x28] sm:$0xf]
      %v837 = vld [vmem:[%s828 + $0x8] sm:$0x1]
      %v838 = vld [vmem:[%s828 + $0x14] sm:$0x1]
      %v839 = vld [vmem:[%s828 + $0x20] sm:$0x1]
      %v840 = vld [vmem:[%s828 + $0x2c] sm:$0x1]
      %v841 = vld [vmem:[%s828] sm:$0xe]
      %v842 = vld [vmem:[%s828 + $0xc] sm:$0xe]
      %v843 = vld [vmem:[%s828 + $0x18] sm:$0xe]
      %v844 = vld [vmem:[%s828 + $0x24] sm:$0xe]
      %v853 = vunpack.c.l.b16 %v796
      %v854 = vunpack.c.l.b16 %v797
      %v855 = vunpack.c.l.b16 %v798
      %v856 = vunpack.c.l.b16 %v799
      %v857 = vunpack.c.l.b16 %v800
      %v858 = vunpack.c.l.b16 %v801
      %v859 = vunpack.c.l.b16 %v802
      %v860 = vunpack.c.l.b16 %v803
      %v861 = vpack.c.b16 %v854, %v853
      %v862 = vpack.c.b16 %v856, %v855
      %v863 = vpack.c.b16 %v858, %v857
      %v864 = vpack.c.b16 %v860, %v859
      %v869 = vunpack.c.l.b16 %v804
      %v870 = vunpack.c.l.b16 %v805
      %v871 = vunpack.c.l.b16 %v806
      %v872 = vunpack.c.l.b16 %v807
      %v873 = vpack.c.b16 %v869, %v869
      %v874 = vpack.c.b16 %v870, %v870
      %v875 = vpack.c.b16 %v871, %v871
      %v876 = vpack.c.b16 %v872, %v872
      %vm877 = vsmask.f32 7424
      %v879 = vshrl.u32 %v861, 16
      %v881 = vshll.u32 %v861, 16
      %v883 = vrot.slane %v881, 1
      %v884 = vor.u32 %v879, %v883
      %v886 = vshll.u32 %v873, 16
      %v888 = vrot.slane %v886, 1
      %v889 = vsel %vm877, %v884, %v888
      %v891 = vshrl.u32 %v862, 16
      %v893 = vshll.u32 %v862, 16
      %v895 = vrot.slane %v893, 1
      %v896 = vor.u32 %v891, %v895
      %v898 = vshll.u32 %v874, 16
      %v900 = vrot.slane %v898, 1
      %v901 = vsel %vm877, %v896, %v900
      %v903 = vshrl.u32 %v863, 16
      %v905 = vshll.u32 %v863, 16
      %v907 = vrot.slane %v905, 1
      %v908 = vor.u32 %v903, %v907
      %v910 = vshll.u32 %v875, 16
      %v912 = vrot.slane %v910, 1
      %v913 = vsel %vm877, %v908, %v912
      %v915 = vshrl.u32 %v864, 16
      %v917 = vshll.u32 %v864, 16
      %v919 = vrot.slane %v917, 1
      %v920 = vor.u32 %v915, %v919
      %v922 = vshll.u32 %v876, 16
      %v924 = vrot.slane %v922, 1
      %v925 = vsel %vm877, %v920, %v924
      %926 = vrot.lane.b32.xlu0 %v889, 4
      %v927 = vpop.permute.xlu0 %926
      %928 = vrot.lane.b32.xlu0 %v901, 4
      %v929 = vpop.permute.xlu0 %928
      %930 = vrot.lane.b32.xlu0 %v913, 4
      %v931 = vpop.permute.xlu0 %930
      %932 = vrot.lane.b32.xlu0 %v925, 4
      %v933 = vpop.permute.xlu0 %932
      %v938 = vunpack.c.l.b16 %v808
      %v939 = vunpack.c.l.b16 %v809
      %v940 = vunpack.c.l.b16 %v810
      %v941 = vunpack.c.l.b16 %v811
      %v942 = vpack.c.b16 %v854, %v938
      %v943 = vpack.c.b16 %v856, %v939
      %v944 = vpack.c.b16 %v858, %v940
      %v945 = vpack.c.b16 %v860, %v941
      %vm946 = vcmask 1046528
      %v947 = vrot.slane %v942, 1
      %v948 = vrot.slane %v873, 1
      %v949 = vsel %vm946, %v947, %v948
      %v950 = vrot.slane %v943, 1
      %v951 = vrot.slane %v874, 1
      %v952 = vsel %vm946, %v950, %v951
      %v953 = vrot.slane %v944, 1
      %v954 = vrot.slane %v875, 1
      %v955 = vsel %vm946, %v953, %v954
      %v956 = vrot.slane %v945, 1
      %v957 = vrot.slane %v876, 1
      %v958 = vsel %vm946, %v956, %v957
      %959 = vrot.lane.b32.xlu0 %v949, 8
      %v960 = vpop.permute.xlu0 %959
      %961 = vrot.lane.b32.xlu0 %v952, 8
      %v962 = vpop.permute.xlu0 %961
      %963 = vrot.lane.b32.xlu0 %v955, 8
      %v964 = vpop.permute.xlu0 %963
      %965 = vrot.lane.b32.xlu0 %v958, 8
      %v966 = vpop.permute.xlu0 %965
      %v975 = vunpack.c.l.b16 %v812
      %v976 = vunpack.c.l.b16 %v813
      %v977 = vunpack.c.l.b16 %v814
      %v978 = vunpack.c.l.b16 %v815
      %v979 = vunpack.c.l.b16 %v816
      %v980 = vunpack.c.l.b16 %v817
      %v981 = vunpack.c.l.b16 %v818
      %v982 = vunpack.c.l.b16 %v819
      %v983 = vpack.c.b16 %v976, %v975
      %v984 = vpack.c.b16 %v978, %v977
      %v985 = vpack.c.b16 %v980, %v979
      %v986 = vpack.c.b16 %v982, %v981
      %987 = vrot.lane.b32.xlu0 %v983, 12
      %v988 = vpop.permute.xlu0 %987
      %989 = vrot.lane.b32.xlu0 %v984, 12
      %v990 = vpop.permute.xlu0 %989
      %991 = vrot.lane.b32.xlu0 %v985, 12
      %v992 = vpop.permute.xlu0 %991
      %993 = vrot.lane.b32.xlu0 %v986, 12
      %v994 = vpop.permute.xlu0 %993
      %v999 = vunpack.c.l.b16 %v820
      %v1000 = vunpack.c.l.b16 %v821
      %v1001 = vunpack.c.l.b16 %v822
      %v1002 = vunpack.c.l.b16 %v823
      %v1003 = vpack.c.b16 %v999, %v999
      %v1004 = vpack.c.b16 %v1000, %v1000
      %v1005 = vpack.c.b16 %v1001, %v1001
      %v1006 = vpack.c.b16 %v1002, %v1002
      %v1008 = vshrl.u32 %v983, 16
      %v1010 = vshll.u32 %v983, 16
      %v1012 = vrot.slane %v1010, 1
      %v1013 = vor.u32 %v1008, %v1012
      %v1015 = vshll.u32 %v1003, 16
      %v1017 = vrot.slane %v1015, 1
      %v1018 = vsel %vm877, %v1013, %v1017
      %v1020 = vshrl.u32 %v984, 16
      %v1022 = vshll.u32 %v984, 16
      %v1024 = vrot.slane %v1022, 1
      %v1025 = vor.u32 %v1020, %v1024
      %v1027 = vshll.u32 %v1004, 16
      %v1029 = vrot.slane %v1027, 1
      %v1030 = vsel %vm877, %v1025, %v1029
      %v1032 = vshrl.u32 %v985, 16
      %v1034 = vshll.u32 %v985, 16
      %v1036 = vrot.slane %v1034, 1
      %v1037 = vor.u32 %v1032, %v1036
      %v1039 = vshll.u32 %v1005, 16
      %v1041 = vrot.slane %v1039, 1
      %v1042 = vsel %vm877, %v1037, %v1041
      %v1044 = vshrl.u32 %v986, 16
      %v1046 = vshll.u32 %v986, 16
      %v1048 = vrot.slane %v1046, 1
      %v1049 = vor.u32 %v1044, %v1048
      %v1051 = vshll.u32 %v1006, 16
      %v1053 = vrot.slane %v1051, 1
      %v1054 = vsel %vm877, %v1049, %v1053
      %1055 = vrot.lane.b32.xlu0 %v1018, 16
      %v1056 = vpop.permute.xlu0 %1055
      %1057 = vrot.lane.b32.xlu0 %v1030, 16
      %v1058 = vpop.permute.xlu0 %1057
      %1059 = vrot.lane.b32.xlu0 %v1042, 16
      %v1060 = vpop.permute.xlu0 %1059
      %1061 = vrot.lane.b32.xlu0 %v1054, 16
      %v1062 = vpop.permute.xlu0 %1061
      %v1067 = vunpack.c.l.b16 %v824
      %v1068 = vunpack.c.l.b16 %v825
      %v1069 = vunpack.c.l.b16 %v826
      %v1070 = vunpack.c.l.b16 %v827
      %v1071 = vpack.c.b16 %v976, %v1067
      %v1072 = vpack.c.b16 %v978, %v1068
      %v1073 = vpack.c.b16 %v980, %v1069
      %v1074 = vpack.c.b16 %v982, %v1070
      %v1075 = vrot.slane %v1071, 1
      %v1076 = vrot.slane %v1003, 1
      %v1077 = vsel %vm946, %v1075, %v1076
      %v1078 = vrot.slane %v1072, 1
      %v1079 = vrot.slane %v1004, 1
      %v1080 = vsel %vm946, %v1078, %v1079
      %v1081 = vrot.slane %v1073, 1
      %v1082 = vrot.slane %v1005, 1
      %v1083 = vsel %vm946, %v1081, %v1082
      %v1084 = vrot.slane %v1074, 1
      %v1085 = vrot.slane %v1006, 1
      %v1086 = vsel %vm946, %v1084, %v1085
      %1087 = vrot.lane.b32.xlu0 %v1077, 20
      %v1088 = vpop.permute.xlu0 %1087
      %1089 = vrot.lane.b32.xlu0 %v1080, 20
      %v1090 = vpop.permute.xlu0 %1089
      %1091 = vrot.lane.b32.xlu0 %v1083, 20
      %v1092 = vpop.permute.xlu0 %1091
      %1093 = vrot.lane.b32.xlu0 %v1086, 20
      %v1094 = vpop.permute.xlu0 %1093
      %v1103 = vunpack.c.l.b16 %v829
      %v1104 = vunpack.c.l.b16 %v830
      %v1105 = vunpack.c.l.b16 %v831
      %v1106 = vunpack.c.l.b16 %v832
      %v1107 = vunpack.c.l.b16 %v833
      %v1108 = vunpack.c.l.b16 %v834
      %v1109 = vunpack.c.l.b16 %v835
      %v1110 = vunpack.c.l.b16 %v836
      %v1111 = vpack.c.b16 %v1104, %v1103
      %v1112 = vpack.c.b16 %v1106, %v1105
      %v1113 = vpack.c.b16 %v1108, %v1107
      %v1114 = vpack.c.b16 %v1110, %v1109
      %1115 = vrot.lane.b32.xlu0 %v1111, 24
      %v1116 = vpop.permute.xlu0 %1115
      %1117 = vrot.lane.b32.xlu0 %v1112, 24
      %v1118 = vpop.permute.xlu0 %1117
      %1119 = vrot.lane.b32.xlu0 %v1113, 24
      %v1120 = vpop.permute.xlu0 %1119
      %1121 = vrot.lane.b32.xlu0 %v1114, 24
      %v1122 = vpop.permute.xlu0 %1121
      %v1127 = vunpack.c.l.b16 %v837
      %v1128 = vunpack.c.l.b16 %v838
      %v1129 = vunpack.c.l.b16 %v839
      %v1130 = vunpack.c.l.b16 %v840
      %v1131 = vpack.c.b16 %v1127, %v1127
      %v1132 = vpack.c.b16 %v1128, %v1128
      %v1133 = vpack.c.b16 %v1129, %v1129
      %v1134 = vpack.c.b16 %v1130, %v1130
      %v1136 = vshrl.u32 %v1111, 16
      %v1138 = vshll.u32 %v1111, 16
      %v1140 = vrot.slane %v1138, 1
      %v1141 = vor.u32 %v1136, %v1140
      %v1143 = vshll.u32 %v1131, 16
      %v1145 = vrot.slane %v1143, 1
      %v1146 = vsel %vm877, %v1141, %v1145
      %v1148 = vshrl.u32 %v1112, 16
      %v1150 = vshll.u32 %v1112, 16
      %v1152 = vrot.slane %v1150, 1
      %v1153 = vor.u32 %v1148, %v1152
      %v1155 = vshll.u32 %v1132, 16
      %v1157 = vrot.slane %v1155, 1
      %v1158 = vsel %vm877, %v1153, %v1157
      %v1160 = vshrl.u32 %v1113, 16
      %v1162 = vshll.u32 %v1113, 16
      %v1164 = vrot.slane %v1162, 1
      %v1165 = vor.u32 %v1160, %v1164
      %v1167 = vshll.u32 %v1133, 16
      %v1169 = vrot.slane %v1167, 1
      %v1170 = vsel %vm877, %v1165, %v1169
      %v1172 = vshrl.u32 %v1114, 16
      %v1174 = vshll.u32 %v1114, 16
      %v1176 = vrot.slane %v1174, 1
      %v1177 = vor.u32 %v1172, %v1176
      %v1179 = vshll.u32 %v1134, 16
      %v1181 = vrot.slane %v1179, 1
      %v1182 = vsel %vm877, %v1177, %v1181
      %1183 = vrot.lane.b32.xlu0 %v1146, 28
      %v1184 = vpop.permute.xlu0 %1183
      %1185 = vrot.lane.b32.xlu0 %v1158, 28
      %v1186 = vpop.permute.xlu0 %1185
      %1187 = vrot.lane.b32.xlu0 %v1170, 28
      %v1188 = vpop.permute.xlu0 %1187
      %1189 = vrot.lane.b32.xlu0 %v1182, 28
      %v1190 = vpop.permute.xlu0 %1189
      %v1195 = vunpack.c.l.b16 %v841
      %v1196 = vunpack.c.l.b16 %v842
      %v1197 = vunpack.c.l.b16 %v843
      %v1198 = vunpack.c.l.b16 %v844
      %v1199 = vpack.c.b16 %v1104, %v1195
      %v1200 = vpack.c.b16 %v1106, %v1196
      %v1201 = vpack.c.b16 %v1108, %v1197
      %v1202 = vpack.c.b16 %v1110, %v1198
      %v1203 = vrot.slane %v1199, 1
      %v1204 = vrot.slane %v1131, 1
      %v1205 = vsel %vm946, %v1203, %v1204
      %v1206 = vrot.slane %v1200, 1
      %v1207 = vrot.slane %v1132, 1
      %v1208 = vsel %vm946, %v1206, %v1207
      %v1209 = vrot.slane %v1201, 1
      %v1210 = vrot.slane %v1133, 1
      %v1211 = vsel %vm946, %v1209, %v1210
      %v1212 = vrot.slane %v1202, 1
      %v1213 = vrot.slane %v1134, 1
      %v1214 = vsel %vm946, %v1212, %v1213
      %1215 = vrot.lane.b32.xlu0 %v1205, 32
      %v1216 = vpop.permute.xlu0 %1215
      %1217 = vrot.lane.b32.xlu0 %v1208, 32
      %v1218 = vpop.permute.xlu0 %1217
      %1219 = vrot.lane.b32.xlu0 %v1211, 32
      %v1220 = vpop.permute.xlu0 %1219
      %1221 = vrot.lane.b32.xlu0 %v1214, 32
      %v1222 = vpop.permute.xlu0 %1221
      %vm1223 = vcmask 31744
      %v1225 = vsel %vm1223, %v861, %v927
      %v1227 = vsel %vm1223, %v862, %v929
      %v1229 = vsel %vm1223, %v863, %v931
      %v1231 = vsel %vm1223, %v864, %v933
      %vm1232 = vcmask 64512
      %v1234 = vsel %vm1232, %v1225, %v960
      %v1236 = vsel %vm1232, %v1227, %v962
      %v1238 = vsel %vm1232, %v1229, %v964
      %v1240 = vsel %vm1232, %v1231, %v966
      %vm1241 = vcmask 97280
      %v1243 = vsel %vm1241, %v1234, %v988
      %v1245 = vsel %vm1241, %v1236, %v990
      %v1247 = vsel %vm1241, %v1238, %v992
      %v1249 = vsel %vm1241, %v1240, %v994
      %vm1250 = vcmask 130048
      %v1252 = vsel %vm1250, %v1243, %v1056
      %v1254 = vsel %vm1250, %v1245, %v1058
      %v1256 = vsel %vm1250, %v1247, %v1060
      %v1258 = vsel %vm1250, %v1249, %v1062
      %vm1259 = vcmask 162816
      %v1261 = vsel %vm1259, %v1252, %v1088
      %v1263 = vsel %vm1259, %v1254, %v1090
      %v1265 = vsel %vm1259, %v1256, %v1092
      %v1267 = vsel %vm1259, %v1258, %v1094
      %vm1268 = vcmask 195584
      %v1270 = vsel %vm1268, %v1261, %v1116
      %v1272 = vsel %vm1268, %v1263, %v1118
      %v1274 = vsel %vm1268, %v1265, %v1120
      %v1276 = vsel %vm1268, %v1267, %v1122
      %vm1277 = vcmask 228352
      %v1279 = vsel %vm1277, %v1270, %v1184
      %v1281 = vsel %vm1277, %v1272, %v1186
      %v1283 = vsel %vm1277, %v1274, %v1188
      %v1285 = vsel %vm1277, %v1276, %v1190
      %vm1286 = vcmask 261120
      %v1288 = vsel %vm1286, %v1279, %v1216
      %v1290 = vsel %vm1286, %v1281, %v1218
      %v1292 = vsel %vm1286, %v1283, %v1220
      %v1294 = vsel %vm1286, %v1285, %v1222
      %v1295 = vld [vmem:[%s544] sm:$0xf]
      %v1296 = vld [vmem:[%s544 + $0x4] sm:$0xf]
      %v1297 = vld [vmem:[%s544 + $0x8] sm:$0xf]
      %v1298 = vld [vmem:[%s544 + $0xc] sm:$0xf]
      %v1299 = vld [vmem:[%s544 + $0x10] sm:$0x3]
      %v1300 = vld [vmem:[%s547] sm:$0x1]
      %v1302 = vlaneseq
      %v1303 = vshrl.u32 %v1302, 7
      %v1304 = vsub.s32 0, %v1303
      %v1305 = vrot.slane %v1300, %v1304
      %v1312 = vunpack.c.l.b16 %v1295
      %v1313 = vunpack.c.l.b16 %v1296
      %v1314 = vunpack.c.l.b16 %v1297
      %v1315 = vunpack.c.l.b16 %v1298
      %v1316 = vunpack.c.l.b16 %v1299
      %v1317 = vpack.c.b16 %v1313, %v1312
      %v1318 = vpack.c.b16 %v1315, %v1314
      %v1319 = vpack.c.b16 %v1316, %v1316
      %vm1322 = vcmask 293888
      %v1323 = vsel %vm1322, %v1288, 0
      %v1325 = vsel %vm1322, %v1290, 0
      %v1327 = vsel %vm1322, %v1292, 0
      %v1329 = vsel %vm1322, %v1294, 0
      %vm1331 = vcmask 1041408
      %v1333 = vsel %vm1331, %v1319, 0
      %1335 = vmatprep.subr.bf16.mxu0 0
      %1336 = vmatpush1.bf16.msra.mxu0 %v1317
      %1337 = vmatprep.subr.bf16.mxu0 0
      %1338 = vmatpush1.bf16.msra.mxu0 %v1318
      %1339 = vmatprep.subr.bf16.mxu0 0
      %1340 = vmatpush1.bf16.msra.mxu0 %v1333
      %1341 = vmatprep.subr.bf16.mxu0 0
      %1342 = vmatpush1.bf16.msra.mxu0 0
      %1343 = vmatprep.subr.bf16.mxu0 0
      %1344 = vmatpush1.bf16.msra.mxu0 0
      %1345 = vmatprep.subr.bf16.mxu0 0
      %1346 = vmatpush1.bf16.msra.mxu0 0
      %1347 = vmatprep.subr.bf16.mxu0 0
      %1348 = vmatpush1.bf16.msra.mxu0 0
      %1349 = vmatprep.subr.bf16.mxu0 0
      %1350 = vmatpush1.bf16.msra.mxu0 0
      %1351 = vmatprep.subr.bf16.mxu0 0
      %1352 = vmatpush1.bf16.msra.mxu0 0
      %1353 = vmatprep.subr.bf16.mxu0 0
      %1354 = vmatpush1.bf16.msra.mxu0 0
      %1355 = vmatprep.subr.bf16.mxu0 0
      %1356 = vmatpush1.bf16.msra.mxu0 0
      %1357 = vmatprep.subr.bf16.mxu0 0
      %1358 = vmatpush1.bf16.msra.mxu0 0
      %1359 = vmatprep.subr.bf16.mxu0 0
      %1360 = vmatpush1.bf16.msra.mxu0 0
      %1361 = vmatprep.subr.bf16.mxu0 0
      %1362 = vmatpush1.bf16.msra.mxu0 0
      %1363 = vmatprep.subr.bf16.mxu0 0
      %1364 = vmatpush1.bf16.msra.mxu0 0
      %1365 = vmatprep.subr.bf16.mxu0 0
      %1366 = vmatpush1.bf16.msra.mxu0 0
      %1367 = vmatprep.mubr.bf16.mxu0 0
      %1368 = vmatmul.mubr.bf16.gmra.mrb[0].mxu0 %v1323
      %v1369 = vpop.f32.mrb[0].mxu0
      %v1370 = vadd.f32 %v1305, %v1369
      %v1371 = vpop.f32.mrb[0].mxu0
      %v1372 = vpop.f32.mrb[0].mxu0
      %v1373 = vadd.f32 %v1305, %v1372
      %v1374 = vpop.f32.mrb[0].mxu0
      %1375 = vmatprep.mubr.bf16.mxu0 0
      %1376 = vmatmul.mubr.bf16.gmra.mrb[0].mxu0 %v1325
      %v1377 = vpop.f32.mrb[0].mxu0
      %v1378 = vadd.f32 %v1305, %v1377
      %v1379 = vpop.f32.mrb[0].mxu0
      %v1380 = vpop.f32.mrb[0].mxu0
      %v1381 = vadd.f32 %v1305, %v1380
      %v1382 = vpop.f32.mrb[0].mxu0
      %1383 = vmatprep.mubr.bf16.mxu0 0
      %1384 = vmatmul.mubr.bf16.gmra.mrb[0].mxu0 %v1327
      %v1385 = vpop.f32.mrb[0].mxu0
      %v1386 = vadd.f32 %v1305, %v1385
      %v1387 = vpop.f32.mrb[0].mxu0
      %v1388 = vpop.f32.mrb[0].mxu0
      %v1389 = vadd.f32 %v1305, %v1388
      %v1390 = vpop.f32.mrb[0].mxu0
      %1391 = vmatprep.mubr.bf16.mxu0 0
      %1392 = vmatmul.mubr.bf16.gmra.mrb[0].mxu0 %v1329
      %v1393 = vpop.f32.mrb[0].mxu0
      %v1394 = vadd.f32 %v1305, %v1393
      %v1395 = vpop.f32.mrb[0].mxu0
      %v1396 = vpop.f32.mrb[0].mxu0
      %v1397 = vadd.f32 %v1305, %v1396
      %v1398 = vpop.f32.mrb[0].mxu0
      %1399 = vdwg.mxu0
      %v1400 = vmax.f32 %v1370, 0.0
      %v1401 = vmax.f32 %v1373, 0.0
      %v1402 = vmax.f32 %v1378, 0.0
      %v1403 = vmax.f32 %v1381, 0.0
      %v1404 = vmax.f32 %v1386, 0.0
      %v1405 = vmax.f32 %v1389, 0.0
      %v1406 = vmax.f32 %v1394, 0.0
      %v1407 = vmax.f32 %v1397, 0.0
      %v1408 = vpack.c.bf16 %v1401, %v1400
      %v1409 = vpack.c.bf16 %v1403, %v1402
      %v1410 = vpack.c.bf16 %v1405, %v1404
      %v1411 = vpack.c.bf16 %v1407, %v1406
      %v1416 = vunpack.c.l.b16 %v1408
      %v1417 = vunpack.c.h.b16 %v1408
      %v1418 = vunpack.c.l.b16 %v1409
      %v1419 = vunpack.c.h.b16 %v1409
      %v1420 = vunpack.c.l.b16 %v1410
      %v1421 = vunpack.c.h.b16 %v1410
      %v1422 = vunpack.c.l.b16 %v1411
      %v1423 = vunpack.c.h.b16 %v1411
      %v1424 = vpack.c.b16 %v1416, %v1416
      %v1425 = vpack.c.b16 %v1417, %v1417
      %v1426 = vpack.c.b16 %v1418, %v1418
      %v1427 = vpack.c.b16 %v1419, %v1419
      %v1428 = vpack.c.b16 %v1420, %v1420
      %v1429 = vpack.c.b16 %v1421, %v1421
      %v1430 = vpack.c.b16 %v1422, %v1422
      %v1431 = vpack.c.b16 %v1423, %v1423
      %vm1440 = vcmask 60416
      %1441 = vst.msk [vmem:[%s566] sm:$0xf] %vm1440, %v1424
      %1442 = vst.msk [vmem:[%s566 + $0x4] sm:$0xf] %vm1440, %v1425
      %1443 = vst.msk [vmem:[%s566 + $0x8] sm:$0xf] %vm1440, %v1426
      %1444 = vst.msk [vmem:[%s566 + $0xc] sm:$0xf] %vm1440, %v1427
      %1445 = vst.msk [vmem:[%s566 + $0x10] sm:$0xf] %vm1440, %v1428
      %1446 = vst.msk [vmem:[%s566 + $0x14] sm:$0xf] %vm1440, %v1429
      %1447 = vst.msk [vmem:[%s566 + $0x18] sm:$0xf] %vm1440, %v1430
      %1448 = vst.msk [vmem:[%s566 + $0x1c] sm:$0xf] %vm1440, %v1431
      %v1449 = vld [vmem:[%s693] sm:$0xf]
      %v1450 = vld [vmem:[%s693 + $0x4] sm:$0xf]
      %v1451 = vld [vmem:[%s693 + $0x8] sm:$0x1]
      %v1452 = vld [vmem:[%s693 + $0xc] sm:$0xf]
      %v1453 = vld [vmem:[%s693 + $0x10] sm:$0xf]
      %v1454 = vld [vmem:[%s693 + $0x14] sm:$0x1]
      %v1455 = vld [vmem:[%s693 + $0x18] sm:$0xf]
      %v1456 = vld [vmem:[%s693 + $0x1c] sm:$0xf]
      %v1457 = vld [vmem:[%s693 + $0x20] sm:$0x1]
      %v1458 = vld [vmem:[%s693 + $0x24] sm:$0xf]
      %v1459 = vld [vmem:[%s693 + $0x28] sm:$0xf]
      %v1460 = vld [vmem:[%s693 + $0x2c] sm:$0x1]
      %vm1461 = vsmask.f32 3328
      %vm1462 = vsmask.f32 7440
      %vm1463 = vmor %vm1461, %vm1462
      %v1465 = vshrl.u32 %v1449, 16
      %v1467 = vrot.slane %v1465, 4
      %v1468 = vshll.u32 %v1449, 16
      %v1470 = vrot.slane %v1468, 5
      %v1471 = vor.u32 %v1467, %v1470
      %v1472 = vrot.slane %v1471, 4
      %v1474 = vshll.u32 %v1450, 16
      %v1476 = vrot.slane %v1474, 5
      %v1477 = vsel %vm1463, %v1472, %v1476
      %v1478 = vshrl.u32 %v1450, 16
      %v1480 = vrot.slane %v1478, 4
      %v1481 = vor.u32 %v1480, %v1476
      %v1482 = vrot.slane %v1481, 4
      %v1484 = vshll.u32 %v1451, 16
      %v1486 = vrot.slane %v1484, 5
      %v1487 = vsel %vm1463, %v1482, %v1486
      %v1489 = vshrl.u32 %v1452, 16
      %v1491 = vrot.slane %v1489, 4
      %v1492 = vshll.u32 %v1452, 16
      %v1494 = vrot.slane %v1492, 5
      %v1495 = vor.u32 %v1491, %v1494
      %v1496 = vrot.slane %v1495, 4
      %v1498 = vshll.u32 %v1453, 16
      %v1500 = vrot.slane %v1498, 5
      %v1501 = vsel %vm1463, %v1496, %v1500
      %v1502 = vshrl.u32 %v1453, 16
      %v1504 = vrot.slane %v1502, 4
      %v1505 = vor.u32 %v1504, %v1500
      %v1506 = vrot.slane %v1505, 4
      %v1508 = vshll.u32 %v1454, 16
      %v1510 = vrot.slane %v1508, 5
      %v1511 = vsel %vm1463, %v1506, %v1510
      %v1513 = vshrl.u32 %v1455, 16
      %v1515 = vrot.slane %v1513, 4
      %v1516 = vshll.u32 %v1455, 16
      %v1518 = vrot.slane %v1516, 5
      %v1519 = vor.u32 %v1515, %v1518
      %v1520 = vrot.slane %v1519, 4
      %v1522 = vshll.u32 %v1456, 16
      %v1524 = vrot.slane %v1522, 5
      %v1525 = vsel %vm1463, %v1520, %v1524
      %v1526 = vshrl.u32 %v1456, 16
      %v1528 = vrot.slane %v1526, 4
      %v1529 = vor.u32 %v1528, %v1524
      %v1530 = vrot.slane %v1529, 4
      %v1532 = vshll.u32 %v1457, 16
      %v1534 = vrot.slane %v1532, 5
      %v1535 = vsel %vm1463, %v1530, %v1534
      %v1537 = vshrl.u32 %v1458, 16
      %v1539 = vrot.slane %v1537, 4
      %v1540 = vshll.u32 %v1458, 16
      %v1542 = vrot.slane %v1540, 5
      %v1543 = vor.u32 %v1539, %v1542
      %v1544 = vrot.slane %v1543, 4
      %v1546 = vshll.u32 %v1459, 16
      %v1548 = vrot.slane %v1546, 5
      %v1549 = vsel %vm1463, %v1544, %v1548
      %v1550 = vshrl.u32 %v1459, 16
      %v1552 = vrot.slane %v1550, 4
      %v1553 = vor.u32 %v1552, %v1548
      %v1554 = vrot.slane %v1553, 4
      %v1556 = vshll.u32 %v1460, 16
      %v1558 = vrot.slane %v1556, 5
      %v1559 = vsel %vm1463, %v1554, %v1558
      %v1560 = vld [vmem:[%s551] sm:$0x3]
      %v1561 = vld [vmem:[%s554] sm:$0x1]
      %v1563 = vlaneseq
      %v1564 = vshrl.u32 %v1563, 7
      %v1565 = vsub.s32 0, %v1564
      %v1566 = vrot.slane %v1561, %v1565
      %v1568 = vunpack.c.l.b16 %v1477
      %v1569 = vunpack.c.l.b16 %v1487
      %v1570 = vunpack.c.l.b16 %v1501
      %v1571 = vunpack.c.l.b16 %v1511
      %v1572 = vunpack.c.l.b16 %v1525
      %v1573 = vunpack.c.l.b16 %v1535
      %v1574 = vunpack.c.l.b16 %v1549
      %v1575 = vunpack.c.l.b16 %v1559
      %v1576 = vpack.c.b16 %v1569, %v1568
      %v1577 = vpack.c.b16 %v1571, %v1570
      %v1578 = vpack.c.b16 %v1573, %v1572
      %v1579 = vpack.c.b16 %v1575, %v1574
      %v1581 = vsel %vm1223, %v1576, 0
      %v1584 = vsel %vm1223, %v1577, 0
      %v1587 = vsel %vm1223, %v1578, 0
      %v1590 = vsel %vm1223, %v1579, 0
      %v1593 = vsel %vm1331, %v1560, 0
      %1595 = vmatprep.subr.bf16.mxu0 0
      %1596 = vmatpush1.bf16.msra.mxu0 %v1593
      %1597 = vmatprep.subr.bf16.mxu0 0
      %1598 = vmatpush1.bf16.msra.mxu0 0
      %1599 = vmatprep.subr.bf16.mxu0 0
      %1600 = vmatpush1.bf16.msra.mxu0 0
      %1601 = vmatprep.subr.bf16.mxu0 0
      %1602 = vmatpush1.bf16.msra.mxu0 0
      %1603 = vmatprep.subr.bf16.mxu0 0
      %1604 = vmatpush1.bf16.msra.mxu0 0
      %1605 = vmatprep.subr.bf16.mxu0 0
      %1606 = vmatpush1.bf16.msra.mxu0 0
      %1607 = vmatprep.subr.bf16.mxu0 0
      %1608 = vmatpush1.bf16.msra.mxu0 0
      %1609 = vmatprep.subr.bf16.mxu0 0
      %1610 = vmatpush1.bf16.msra.mxu0 0
      %1611 = vmatprep.subr.bf16.mxu0 0
      %1612 = vmatpush1.bf16.msra.mxu0 0
      %1613 = vmatprep.subr.bf16.mxu0 0
      %1614 = vmatpush1.bf16.msra.mxu0 0
      %1615 = vmatprep.subr.bf16.mxu0 0
      %1616 = vmatpush1.bf16.msra.mxu0 0
      %1617 = vmatprep.subr.bf16.mxu0 0
      %1618 = vmatpush1.bf16.msra.mxu0 0
      %1619 = vmatprep.subr.bf16.mxu0 0
      %1620 = vmatpush1.bf16.msra.mxu0 0
      %1621 = vmatprep.subr.bf16.mxu0 0
      %1622 = vmatpush1.bf16.msra.mxu0 0
      %1623 = vmatprep.subr.bf16.mxu0 0
      %1624 = vmatpush1.bf16.msra.mxu0 0
      %1625 = vmatprep.subr.bf16.mxu0 0
      %1626 = vmatpush1.bf16.msra.mxu0 0
      %1627 = vmatprep.mubr.bf16.mxu0 0
      %1628 = vmatmul.mubr.bf16.gmra.mrb[0].mxu0 %v1581
      %v1629 = vpop.f32.mrb[0].mxu0
      %v1630 = vadd.f32 %v1566, %v1629
      %v1631 = vpop.f32.mrb[0].mxu0
      %v1632 = vpop.f32.mrb[0].mxu0
      %v1633 = vadd.f32 %v1566, %v1632
      %v1634 = vpop.f32.mrb[0].mxu0
      %1635 = vmatprep.mubr.bf16.mxu0 0
      %1636 = vmatmul.mubr.bf16.gmra.mrb[0].mxu0 %v1584
      %v1637 = vpop.f32.mrb[0].mxu0
      %v1638 = vadd.f32 %v1566, %v1637
      %v1639 = vpop.f32.mrb[0].mxu0
      %v1640 = vpop.f32.mrb[0].mxu0
      %v1641 = vadd.f32 %v1566, %v1640
      %v1642 = vpop.f32.mrb[0].mxu0
      %1643 = vmatprep.mubr.bf16.mxu0 0
      %1644 = vmatmul.mubr.bf16.gmra.mrb[0].mxu0 %v1587
      %v1645 = vpop.f32.mrb[0].mxu0
      %v1646 = vadd.f32 %v1566, %v1645
      %v1647 = vpop.f32.mrb[0].mxu0
      %v1648 = vpop.f32.mrb[0].mxu0
      %v1649 = vadd.f32 %v1566, %v1648
      %v1650 = vpop.f32.mrb[0].mxu0
      %1651 = vmatprep.mubr.bf16.mxu0 0
      %1652 = vmatmul.mubr.bf16.gmra.mrb[0].mxu0 %v1590
      %v1653 = vpop.f32.mrb[0].mxu0
      %v1654 = vadd.f32 %v1566, %v1653
      %v1655 = vpop.f32.mrb[0].mxu0
      %v1656 = vpop.f32.mrb[0].mxu0
      %v1657 = vadd.f32 %v1566, %v1656
      %v1658 = vpop.f32.mrb[0].mxu0
      %1659 = vdwg.mxu0
      %v1660 = vpack.c.bf16 %v1633, %v1630
      %v1661 = vpack.c.bf16 %v1641, %v1638
      %v1662 = vpack.c.bf16 %v1649, %v1646
      %v1663 = vpack.c.bf16 %v1657, %v1654
      %v1668 = vunpack.c.l.b16 %v1660
      %v1669 = vunpack.c.h.b16 %v1660
      %v1670 = vunpack.c.l.b16 %v1661
      %v1671 = vunpack.c.h.b16 %v1661
      %v1672 = vunpack.c.l.b16 %v1662
      %v1673 = vunpack.c.h.b16 %v1662
      %v1674 = vunpack.c.l.b16 %v1663
      %v1675 = vunpack.c.h.b16 %v1663
      %v1676 = vpack.c.b16 %v1668, %v1668
      %v1677 = vpack.c.b16 %v1669, %v1669
      %v1678 = vpack.c.b16 %v1670, %v1670
      %v1679 = vpack.c.b16 %v1671, %v1671
      %v1680 = vpack.c.b16 %v1672, %v1672
      %v1681 = vpack.c.b16 %v1673, %v1673
      %v1682 = vpack.c.b16 %v1674, %v1674
      %v1683 = vpack.c.b16 %v1675, %v1675
      %1692 = vst.msk [vmem:[%s579] sm:$0xf] %vm1440, %v1676
      %1693 = vst.msk [vmem:[%s579 + $0x4] sm:$0xf] %vm1440, %v1677
      %1694 = vst.msk [vmem:[%s579 + $0x8] sm:$0xf] %vm1440, %v1678
      %1695 = vst.msk [vmem:[%s579 + $0xc] sm:$0xf] %vm1440, %v1679
      %1696 = vst.msk [vmem:[%s579 + $0x10] sm:$0xf] %vm1440, %v1680
      %1697 = vst.msk [vmem:[%s579 + $0x14] sm:$0xf] %vm1440, %v1681
      %1698 = vst.msk [vmem:[%s579 + $0x18] sm:$0xf] %vm1440, %v1682
      %1699 = vst.msk [vmem:[%s579 + $0x1c] sm:$0xf] %vm1440, %v1683
      %s1700 = smul.u32 8, %s26
      %p1701 = scmp.lt.s32.totalorder %s25, 1
      %s1702 = scalar_select %p1701, %s25, 1
      %p1703 = scmp.lt.s32.totalorder %s1700, 31
      %s1704 = scalar_select %p1703, %s1700, 31
      %p1705 = scmp.lt.s32.totalorder %s27, 0
      %s1706 = scalar_select %p1705, %s27, 0
      %s1707 = sadd.s32 %s1706, %s1704
      %s1708 = smul.addr %s1702, 32
      %s1709 = sadd.s32 %s1707, %s1708
      %s1710 = smul.addr %s1709, 4
      %s1711 = scalar_lea.vmem %s7, %s1710
      %s1712 = smul.u32 8, %s26
      %p1713 = scmp.lt.s32.totalorder %s25, 1
      %s1714 = scalar_select %p1713, %s25, 1
      %p1715 = scmp.lt.s32.totalorder %s1712, 31
      %s1716 = scalar_select %p1715, %s1712, 31
      %p1717 = scmp.lt.s32.totalorder %s27, 0
      %s1718 = scalar_select %p1717, %s27, 0
      %s1719 = sadd.s32 %s1718, %s1716
      %s1720 = smul.addr %s1714, 32
      %s1721 = sadd.s32 %s1719, %s1720
      %s1722 = smul.addr %s1721, 4
      %s1723 = scalar_lea.vmem %s8, %s1722
      // Predicated region
      $region57: #{tpu_custom_call.1} parent=47 // pred_check
        %p1724 = pneg %p265
      $region58: #{tpu_custom_call.1} parent=47 // pred_check_branch
        %1726 = sbr.rel (%p1724) target = $region60
      $region59: #{tpu_custom_call.1} parent=47 // pred_region
        %s1727 = smul.u32 8, %s26
      $region60: #{tpu_custom_call.1} parent=47 // pred_fallthru
        _
      // Predicated region
      $region61: #{tpu_custom_call.1} parent=47 // pred_check
        %p1728 = pneg %p295
      $region62: #{tpu_custom_call.1} parent=47 // pred_check_branch
        %1730 = sbr.rel (%p1728) target = $region64
      $region63: #{tpu_custom_call.1} parent=47 // pred_region
        %s1731 = smul.u32 8, %s26
      $region64: #{tpu_custom_call.1} parent=47 // pred_fallthru
        _
    $region48: #{tpu_custom_call.1} parent=5 // pred_fallthru
      _
    %p1732 = scmp.le.s32.totalorder 2, %s15
    // Predicated region
    $region65: #{tpu_custom_call.1} parent=5 // pred_check
      %p1733 = pneg %p1732
    $region66: #{tpu_custom_call.1} parent=5 // pred_check_branch
      %1735 = sbr.rel (%p1733) target = $region68
    $region67: #{tpu_custom_call.1} parent=5 // pred_region
      %s1736 = ssub.s32 %s15, 2
      // Predicated region
      $region69: #{tpu_custom_call.1} parent=67 // pred_check
        %p1737 = pneg %p271
      $region70: #{tpu_custom_call.1} parent=67 // pred_check_branch
        %1739 = sbr.rel (%p1737) target = $region72
      $region71: #{tpu_custom_call.1} parent=67 // pred_region
        %s1740 = smul.u32 8, %s29
        %p1741 = scmp.lt.s32.totalorder %s28, 1
        %s1742 = scalar_select %p1741, %s28, 1
        %p1743 = scmp.lt.s32.totalorder %s1740, 31
        %s1744 = scalar_select %p1743, %s1740, 31
        %p1745 = scmp.lt.s32.totalorder %s30, 0
        %s1746 = scalar_select %p1745, %s30, 0
        %s1747 = sadd.s32 %s1746, %s1744
        %s1748 = smul.addr %s1742, 32
        %s1749 = sadd.s32 %s1747, %s1748
        %s1750 = smul.addr %s1749, 4
        %s1751 = scalar_lea.vmem %s7, %s1750
      $region72: #{tpu_custom_call.1} parent=67 // pred_fallthru
        _
      // Predicated region
      $region73: #{tpu_custom_call.1} parent=67 // pred_check
        %p1752 = pneg %p301
      $region74: #{tpu_custom_call.1} parent=67 // pred_check_branch
        %1754 = sbr.rel (%p1752) target = $region76
      $region75: #{tpu_custom_call.1} parent=67 // pred_region
        %s1755 = smul.u32 8, %s29
        %p1756 = scmp.lt.s32.totalorder %s28, 1
        %s1757 = scalar_select %p1756, %s28, 1
        %p1758 = scmp.lt.s32.totalorder %s1755, 31
        %s1759 = scalar_select %p1758, %s1755, 31
        %p1760 = scmp.lt.s32.totalorder %s30, 0
        %s1761 = scalar_select %p1760, %s30, 0
        %s1762 = sadd.s32 %s1761, %s1759
        %s1763 = smul.addr %s1757, 32
        %s1764 = sadd.s32 %s1762, %s1763
        %s1765 = smul.addr %s1764, 4
        %s1766 = scalar_lea.vmem %s8, %s1765
      $region76: #{tpu_custom_call.1} parent=67 // pred_fallthru
        _
    $region68: #{tpu_custom_call.1} parent=5 // pred_fallthru
      _
  $region6: #{tpu_custom_call.1} parent=0 // loop_footer
    %s19 = sadd.s32 1, %s15
  $region7: #{tpu_custom_call.1} parent=0 // loop_footer_branch
    %14 = sbr.rel target = $region3
  $region8: #{tpu_custom_call.1} parent=0 // loop_exit
    _

</llo_original>
